<compile_context>
chip_gen: v7x
topology: tpu7x:2x2x1
jax: 0.10.0
libtpu: 0.0.40
codegen_flags: <defaults>
</compile_context>

<pallas_src>
import jax
import jax.numpy as jnp
import numpy as np
from jax import lax
from jax.experimental import pallas as pl
from jax.experimental.pallas import tpu as pltpu

KERNEL_SIZE = 7


def _make_kernel(C, H, W, K):
    """Kernel factory closing over static shape constants."""
    HW = H * W
    pad = K // 2
    inv_c = 1.0 / float(C)

    def kernel(w_ref, b_ref, x_ref, o_ref, max_sc, sum_sc):
        # w_ref : (2*K*K,) f32 SMEM  -- flattened conv weight (out=1, in=2, K, K)
        # b_ref : (1,)     f32 SMEM  -- conv bias
        # x_ref : (Bt, Ct, HW) VMEM  -- current (batch-block, channel-block)
        # o_ref : (Bt, HW)     VMEM  -- output block (resident across the C axis)
        # max_sc, sum_sc : (Bt, HW) f32 VMEM scratch -- running channel max / sum
        k = pl.program_id(1)
        x = x_ref[...].astype(jnp.float32)              # (Bt, Ct, HW)
        blk_max = jnp.max(x, axis=1)                    # (Bt, HW)
        blk_sum = jnp.sum(x, axis=1)                    # (Bt, HW)

        @pl.when(k == 0)
        def _():
            max_sc[...] = blk_max
            sum_sc[...] = blk_sum

        @pl.when(k != 0)
        def _():
            max_sc[...] = jnp.maximum(max_sc[...], blk_max)
            sum_sc[...] = sum_sc[...] + blk_sum

        @pl.when(k == pl.num_programs(1) - 1)
        def _():
            Bt = o_ref.shape[0]
            max_map = max_sc[...]                       # torch.max(x, dim=1)
            avg_map = sum_sc[...] * inv_c               # torch.mean(x, dim=1)
            maps = (max_map, avg_map)                   # channel order of torch.cat

            # Flat lane index and in-row column index (computed once).
            p_idx = lax.broadcasted_iota(jnp.int32, (Bt, HW), 1)
            col = p_idx % W

            acc = jnp.full((Bt, HW), b_ref[0], dtype=jnp.float32)
            for c in range(2):
                m = maps[c]
                # 7 row shifts (by dh*W lanes, zero-filled), reused for every kw.
                row_sh = []
                for dh in range(-pad, pad + 1):
                    s = dh * W
                    if dh == 0:
                        row_sh.append(m)
                    else:
                        rolled = pltpu.roll(m, shift=(-s) % HW, axis=1)
                        valid = (p_idx < HW - s) if s > 0 else (p_idx >= -s)
                        row_sh.append(jnp.where(valid, rolled, 0.0))
                # Per kw tap: kh-weighted sum of the row shifts, then a single
                # column (lane) shift with an edge mask.
                for dw in range(-pad, pad + 1):
                    kw = dw + pad
                    s_ckw = row_sh[0] * w_ref[c * K * K + kw]          # kh = 0
                    for kh in range(1, K):
                        s_ckw = s_ckw + row_sh[kh] * w_ref[c * K * K + kh * K + kw]
                    if dw == 0:
                        acc = acc + s_ckw
                    else:
                        rolled = pltpu.roll(s_ckw, shift=(-dw) % HW, axis=1)
                        cvalid = (col < W - dw) if dw > 0 else (col >= -dw)
                        acc = acc + jnp.where(cvalid, rolled, 0.0)

            out = 1.0 / (1.0 + jnp.exp(-acc))           # sigmoid (exp rides the EUP)
            o_ref[...] = out.astype(o_ref.dtype)

    return kernel


def spatial_attention(x, weight, bias):
    """x: (B, C, H, W); weight: (1, 2, K, K); bias: (1,). Returns (B, 1, H, W)."""
    B, C, H, W = x.shape
    K = weight.shape[-1]
    HW = H * W

    x_flat = x.reshape(B, C, HW)                        # lane-dense spatial axis
    w_flat = weight.reshape(-1).astype(jnp.float32)     # (2*K*K,)
    b = bias.reshape(-1).astype(jnp.float32)            # (1,)

    itemsize = x.dtype.itemsize
    budget = 4 << 20  # per-block VMEM budget (pipeline double-buffers it)

    # Batch blocking: pack as many samples per step as fit the budget so tiny
    # samples don't each pay a full grid-step of pipeline overhead.
    cap = max(1, budget // max(C * HW * itemsize, 1))
    bt_cands = [d for d in range(1, B + 1) if B % d == 0 and d <= cap]
    bt_pref = [d for d in bt_cands if d == B or d % 8 == 0]
    bt = max(bt_pref) if bt_pref else max(bt_cands)

    # Channel tiling (grid reduction axis): only split C if one block is large
    # (keeps the kernel safe on v7x's 64 MiB VMEM for big C).
    ct_cands = [d for d in range(1, C + 1)
                if C % d == 0 and bt * d * HW * itemsize <= budget]
    ct_pref = [d for d in ct_cands if d == C or d % 8 == 0]
    ct = max(ct_pref) if ct_pref else (max(ct_cands) if ct_cands else 1)

    kernel = _make_kernel(C, H, W, K)
    out_flat = pl.pallas_call(
        kernel,
        out_shape=jax.ShapeDtypeStruct((B, HW), x.dtype),
        grid=(B // bt, C // ct),
        in_specs=[
            pl.BlockSpec(memory_space=pltpu.MemorySpace.SMEM),   # conv weights
            pl.BlockSpec(memory_space=pltpu.MemorySpace.SMEM),   # conv bias
            pl.BlockSpec((bt, ct, HW), lambda bi, ki: (bi, ki, 0)),
        ],
        out_specs=pl.BlockSpec((bt, HW), lambda bi, ki: (bi, 0)),
        scratch_shapes=[
            pltpu.VMEM((bt, HW), jnp.float32),   # running channel max
            pltpu.VMEM((bt, HW), jnp.float32),   # running channel sum
        ],
        compiler_params=pltpu.CompilerParams(
            dimension_semantics=("parallel", "arbitrary"),
        ),
    )(w_flat, b, x_flat)

    return out_flat.reshape(B, 1, H, W)


def spatial_attention_ref(x, weight, bias):
    """Plain-JAX reference mirroring the PyTorch forward."""
    max_map = jnp.max(x, axis=1, keepdims=True)
    avg_map = jnp.mean(x, axis=1, keepdims=True)
    result = jnp.concatenate([max_map, avg_map], axis=1)       # (B, 2, H, W)
    pad = weight.shape[-1] // 2
    out = lax.conv_general_dilated(
        result, weight,
        window_strides=(1, 1),
        padding=[(pad, pad), (pad, pad)],
        dimension_numbers=("NCHW", "OIHW", "NCHW"),
    ) + bias.reshape(1, -1, 1, 1)
    return jax.nn.sigmoid(out)


if __name__ == "__main__":
    key = jax.random.PRNGKey(0)
    kx, kwt, kb = jax.random.split(key, 3)

    B, C, H, W = 2, 4, 16, 16
    x = jax.random.normal(kx, (B, C, H, W), dtype=jnp.float32)

    # Deterministic synthetic parameters (shapes from nn.Conv2d(2, 1, 7, padding=3)).
    weight = jax.random.normal(kwt, (1, 2, KERNEL_SIZE, KERNEL_SIZE), dtype=jnp.float32) * 0.1
    bias = jax.random.normal(kb, (1,), dtype=jnp.float32) * 0.1

    out = spatial_attention(x, weight, bias)
    out = jax.block_until_ready(out)

    ref = spatial_attention_ref(x, weight, bias)
    np.testing.assert_allclose(np.asarray(out), np.asarray(ref), rtol=1e-5, atol=1e-5)
    assert out.shape == (B, 1, H, W)

    print("KERNEL_OK")
</pallas_src>

<mosaic_0001>
module attributes {stable_mosaic.version = 11 : i64} {
  func.func @kernel(%arg0: i32, %arg1: i32, %arg2: memref<98xf32, #tpu.memory_space<smem>>, %arg3: memref<1xf32, #tpu.memory_space<smem>>, %arg4: memref<2x4x256xf32, #tpu.memory_space<vmem>>, %arg5: memref<2x256xf32, #tpu.memory_space<vmem>>, %arg6: memref<2x256xf32, #tpu.memory_space<vmem>>, %arg7: memref<2x256xf32, #tpu.memory_space<vmem>>) attributes {dimension_semantics = [#tpu.dimension_semantics<parallel>, #tpu.dimension_semantics<arbitrary>], iteration_bounds = array<i64: 1, 1>, scalar_prefetch = 0 : i64, scratch_operands = 2 : i64, tpu.core_type = #tpu.core_type<tc>, window_params = [{transform_indices = @transform_0, window_bounds = array<i64: 98>}, {transform_indices = @transform_1, window_bounds = array<i64: 1>}, {transform_indices = @transform_2, window_bounds = array<i64: 2, 4, 256>}, {transform_indices = @transform_3, window_bounds = array<i64: 2, 256>}]} {
    %c0 = arith.constant 0 : index
    %c0_0 = arith.constant 0 : index
    %c0_1 = arith.constant 0 : index
    %0 = vector.load %arg4[%c0, %c0_0, %c0_1] : memref<2x4x256xf32, #tpu.memory_space<vmem>>, vector<2x4x256xf32>
    %cst = arith.constant dense<0xFF800000> : vector<2x256xf32>
    %1 = vector.multi_reduction <maximumf>, %0, %cst [1] : vector<2x4x256xf32> to vector<2x256xf32>
    %cst_2 = arith.constant dense<0.000000e+00> : vector<2x256xf32>
    %2 = vector.multi_reduction <add>, %0, %cst_2 [1] : vector<2x4x256xf32> to vector<2x256xf32>
    %c0_i32 = arith.constant 0 : i32
    %3 = arith.cmpi eq, %arg1, %c0_i32 : i32
    %4 = arith.extui %3 : i1 to i32
    %c0_i32_3 = arith.constant 0 : i32
    %5 = arith.cmpi ne, %4, %c0_i32_3 : i32
    scf.if %5 {
      %c0_8 = arith.constant 0 : index
      %c0_9 = arith.constant 0 : index
      %12 = vector.load %arg6[%c0_8, %c0_9] : memref<2x256xf32, #tpu.memory_space<vmem>>, vector<2x256xf32>
      tpu.vector_store %arg6[%c0_8, %c0_9], %1 {strides = array<i32>} : memref<2x256xf32, #tpu.memory_space<vmem>>, vector<2x256xf32>,
      %c0_10 = arith.constant 0 : index
      %c0_11 = arith.constant 0 : index
      %13 = vector.load %arg7[%c0_10, %c0_11] : memref<2x256xf32, #tpu.memory_space<vmem>>, vector<2x256xf32>
      tpu.vector_store %arg7[%c0_10, %c0_11], %2 {strides = array<i32>} : memref<2x256xf32, #tpu.memory_space<vmem>>, vector<2x256xf32>,
    } else {
    }
    %c0_i32_4 = arith.constant 0 : i32
    %6 = arith.cmpi ne, %arg1, %c0_i32_4 : i32
    %7 = arith.extui %6 : i1 to i32
    %c0_i32_5 = arith.constant 0 : i32
    %8 = arith.cmpi ne, %7, %c0_i32_5 : i32
    scf.if %8 {
      %c0_8 = arith.constant 0 : index
      %c0_9 = arith.constant 0 : index
      %12 = vector.load %arg6[%c0_8, %c0_9] : memref<2x256xf32, #tpu.memory_space<vmem>>, vector<2x256xf32>
      %13 = arith.maximumf %12, %1 : vector<2x256xf32>
      %c0_10 = arith.constant 0 : index
      %c0_11 = arith.constant 0 : index
      %14 = vector.load %arg6[%c0_10, %c0_11] : memref<2x256xf32, #tpu.memory_space<vmem>>, vector<2x256xf32>
      tpu.vector_store %arg6[%c0_10, %c0_11], %13 {strides = array<i32>} : memref<2x256xf32, #tpu.memory_space<vmem>>, vector<2x256xf32>,
      %c0_12 = arith.constant 0 : index
      %c0_13 = arith.constant 0 : index
      %15 = vector.load %arg7[%c0_12, %c0_13] : memref<2x256xf32, #tpu.memory_space<vmem>>, vector<2x256xf32>
      %16 = arith.addf %15, %2 : vector<2x256xf32>
      %c0_14 = arith.constant 0 : index
      %c0_15 = arith.constant 0 : index
      %17 = vector.load %arg7[%c0_14, %c0_15] : memref<2x256xf32, #tpu.memory_space<vmem>>, vector<2x256xf32>
      tpu.vector_store %arg7[%c0_14, %c0_15], %16 {strides = array<i32>} : memref<2x256xf32, #tpu.memory_space<vmem>>, vector<2x256xf32>,
    } else {
    }
    %c0_i32_6 = arith.constant 0 : i32
    %9 = arith.cmpi eq, %arg1, %c0_i32_6 : i32
    %10 = arith.extui %9 : i1 to i32
    %c0_i32_7 = arith.constant 0 : i32
    %11 = arith.cmpi ne, %10, %c0_i32_7 : i32
    scf.if %11 {
      %c0_8 = arith.constant 0 : index
      %c0_9 = arith.constant 0 : index
      %12 = vector.load %arg6[%c0_8, %c0_9] : memref<2x256xf32, #tpu.memory_space<vmem>>, vector<2x256xf32>
      %c0_10 = arith.constant 0 : index
      %c0_11 = arith.constant 0 : index
      %13 = vector.load %arg7[%c0_10, %c0_11] : memref<2x256xf32, #tpu.memory_space<vmem>>, vector<2x256xf32>
      %cst_12 = arith.constant 2.500000e-01 : f32
      %14 = vector.broadcast %cst_12 : f32 to vector<2x256xf32>
      %15 = arith.mulf %13, %14 : vector<2x256xf32>
      %16 = tpu.iota {dimensions = array<i32: 1>} : vector<2x256xi32>
      %c16_i32 = arith.constant 16 : i32
      %c0_i32_13 = arith.constant 0 : i32
      %17 = arith.cmpi eq, %c16_i32, %c0_i32_13 : i32
      %c1_i32 = arith.constant 1 : i32
      %18 = arith.select %17, %c1_i32, %c16_i32 : i32
      %19 = vector.broadcast %18 : i32 to vector<2x256xi32>
      %20 = arith.remsi %16, %19 : vector<2x256xi32>
      %c0_i32_14 = arith.constant 0 : i32
      %21 = vector.broadcast %c0_i32_14 : i32 to vector<2x256xi32>
      %22 = arith.cmpi ne, %20, %21 : vector<2x256xi32>
      %c0_i32_15 = arith.constant 0 : i32
      %23 = vector.broadcast %c0_i32_15 : i32 to vector<2x256xi32>
      %24 = arith.cmpi slt, %20, %23 : vector<2x256xi32>
      %c0_i32_16 = arith.constant 0 : i32
      %25 = arith.cmpi slt, %18, %c0_i32_16 : i32
      %26 = vector.broadcast %25 : i1 to vector<2x256xi1>
      %27 = vector.broadcast %26 : vector<2x256xi1> to vector<2x256xi1>
      %28 = arith.xori %24, %27 : vector<2x256xi1>
      %29 = arith.andi %28, %22 : vector<2x256xi1>
      %30 = vector.broadcast %18 : i32 to vector<2x256xi32>
      %31 = arith.addi %20, %30 : vector<2x256xi32>
      %32 = arith.select %29, %31, %20 : vector<2x256xi1>, vector<2x256xi32>
      %c0_17 = arith.constant 0 : index
      %33 = memref.load %arg3[%c0_17] : memref<1xf32, #tpu.memory_space<smem>>
      %34 = vector.broadcast %33 : f32 to vector<2x256xf32>
      %c48_i32 = arith.constant 48 : i32
      %35 = tpu.dynamic_rotate %12 by %c48_i32 dim 1 : vector<2x256xf32>, i32 -> vector<2x256xf32>
      %c48_i32_18 = arith.constant 48 : i32
      %36 = vector.broadcast %c48_i32_18 : i32 to vector<2x256xi32>
      %37 = arith.cmpi sge, %16, %36 : vector<2x256xi32>
      %cst_19 = arith.constant 0.000000e+00 : f32
      %38 = vector.broadcast %cst_19 : f32 to vector<2x256xf32>
      %39 = arith.select %37, %35, %38 : vector<2x256xi1>, vector<2x256xf32>
      %c32_i32 = arith.constant 32 : i32
      %40 = tpu.dynamic_rotate %12 by %c32_i32 dim 1 : vector<2x256xf32>, i32 -> vector<2x256xf32>
      %c32_i32_20 = arith.constant 32 : i32
      %41 = vector.broadcast %c32_i32_20 : i32 to vector<2x256xi32>
      %42 = arith.cmpi sge, %16, %41 : vector<2x256xi32>
      %cst_21 = arith.constant 0.000000e+00 : f32
      %43 = vector.broadcast %cst_21 : f32 to vector<2x256xf32>
      %44 = arith.select %42, %40, %43 : vector<2x256xi1>, vector<2x256xf32>
      %c16_i32_22 = arith.constant 16 : i32
      %45 = tpu.dynamic_rotate %12 by %c16_i32_22 dim 1 : vector<2x256xf32>, i32 -> vector<2x256xf32>
      %c16_i32_23 = arith.constant 16 : i32
      %46 = vector.broadcast %c16_i32_23 : i32 to vector<2x256xi32>
      %47 = arith.cmpi sge, %16, %46 : vector<2x256xi32>
      %cst_24 = arith.constant 0.000000e+00 : f32
      %48 = vector.broadcast %cst_24 : f32 to vector<2x256xf32>
      %49 = arith.select %47, %45, %48 : vector<2x256xi1>, vector<2x256xf32>
      %c240_i32 = arith.constant 240 : i32
      %50 = tpu.dynamic_rotate %12 by %c240_i32 dim 1 : vector<2x256xf32>, i32 -> vector<2x256xf32>
      %c240_i32_25 = arith.constant 240 : i32
      %51 = vector.broadcast %c240_i32_25 : i32 to vector<2x256xi32>
      %52 = arith.cmpi slt, %16, %51 : vector<2x256xi32>
      %cst_26 = arith.constant 0.000000e+00 : f32
      %53 = vector.broadcast %cst_26 : f32 to vector<2x256xf32>
      %54 = arith.select %52, %50, %53 : vector<2x256xi1>, vector<2x256xf32>
      %c224_i32 = arith.constant 224 : i32
      %55 = tpu.dynamic_rotate %12 by %c224_i32 dim 1 : vector<2x256xf32>, i32 -> vector<2x256xf32>
      %c224_i32_27 = arith.constant 224 : i32
      %56 = vector.broadcast %c224_i32_27 : i32 to vector<2x256xi32>
      %57 = arith.cmpi slt, %16, %56 : vector<2x256xi32>
      %cst_28 = arith.constant 0.000000e+00 : f32
      %58 = vector.broadcast %cst_28 : f32 to vector<2x256xf32>
      %59 = arith.select %57, %55, %58 : vector<2x256xi1>, vector<2x256xf32>
      %c208_i32 = arith.constant 208 : i32
      %60 = tpu.dynamic_rotate %12 by %c208_i32 dim 1 : vector<2x256xf32>, i32 -> vector<2x256xf32>
      %c208_i32_29 = arith.constant 208 : i32
      %61 = vector.broadcast %c208_i32_29 : i32 to vector<2x256xi32>
      %62 = arith.cmpi slt, %16, %61 : vector<2x256xi32>
      %cst_30 = arith.constant 0.000000e+00 : f32
      %63 = vector.broadcast %cst_30 : f32 to vector<2x256xf32>
      %64 = arith.select %62, %60, %63 : vector<2x256xi1>, vector<2x256xf32>
      %c0_31 = arith.constant 0 : index
      %65 = memref.load %arg2[%c0_31] : memref<98xf32, #tpu.memory_space<smem>>
      %66 = vector.broadcast %65 : f32 to vector<2x256xf32>
      %67 = arith.mulf %39, %66 : vector<2x256xf32>
      %c7 = arith.constant 7 : index
      %68 = memref.load %arg2[%c7] : memref<98xf32, #tpu.memory_space<smem>>
      %69 = vector.broadcast %68 : f32 to vector<2x256xf32>
      %70 = arith.mulf %44, %69 : vector<2x256xf32>
      %71 = arith.addf %67, %70 : vector<2x256xf32>
      %c14 = arith.constant 14 : index
      %72 = memref.load %arg2[%c14] : memref<98xf32, #tpu.memory_space<smem>>
      %73 = vector.broadcast %72 : f32 to vector<2x256xf32>
      %74 = arith.mulf %49, %73 : vector<2x256xf32>
      %75 = arith.addf %71, %74 : vector<2x256xf32>
      %c21 = arith.constant 21 : index
      %76 = memref.load %arg2[%c21] : memref<98xf32, #tpu.memory_space<smem>>
      %77 = vector.broadcast %76 : f32 to vector<2x256xf32>
      %78 = arith.mulf %12, %77 : vector<2x256xf32>
      %79 = arith.addf %75, %78 : vector<2x256xf32>
      %c28 = arith.constant 28 : index
      %80 = memref.load %arg2[%c28] : memref<98xf32, #tpu.memory_space<smem>>
      %81 = vector.broadcast %80 : f32 to vector<2x256xf32>
      %82 = arith.mulf %54, %81 : vector<2x256xf32>
      %83 = arith.addf %79, %82 : vector<2x256xf32>
      %c35 = arith.constant 35 : index
      %84 = memref.load %arg2[%c35] : memref<98xf32, #tpu.memory_space<smem>>
      %85 = vector.broadcast %84 : f32 to vector<2x256xf32>
      %86 = arith.mulf %59, %85 : vector<2x256xf32>
      %87 = arith.addf %83, %86 : vector<2x256xf32>
      %c42 = arith.constant 42 : index
      %88 = memref.load %arg2[%c42] : memref<98xf32, #tpu.memory_space<smem>>
      %89 = vector.broadcast %88 : f32 to vector<2x256xf32>
      %90 = arith.mulf %64, %89 : vector<2x256xf32>
      %91 = arith.addf %87, %90 : vector<2x256xf32>
      %c3_i32 = arith.constant 3 : i32
      %92 = tpu.dynamic_rotate %91 by %c3_i32 dim 1 : vector<2x256xf32>, i32 -> vector<2x256xf32>
      %c3_i32_32 = arith.constant 3 : i32
      %93 = vector.broadcast %c3_i32_32 : i32 to vector<2x256xi32>
      %94 = arith.cmpi sge, %32, %93 : vector<2x256xi32>
      %cst_33 = arith.constant 0.000000e+00 : f32
      %95 = vector.broadcast %cst_33 : f32 to vector<2x256xf32>
      %96 = arith.select %94, %92, %95 : vector<2x256xi1>, vector<2x256xf32>
      %97 = arith.addf %34, %96 : vector<2x256xf32>
      %c1 = arith.constant 1 : index
      %98 = memref.load %arg2[%c1] : memref<98xf32, #tpu.memory_space<smem>>
      %99 = vector.broadcast %98 : f32 to vector<2x256xf32>
      %100 = arith.mulf %39, %99 : vector<2x256xf32>
      %c8 = arith.constant 8 : index
      %101 = memref.load %arg2[%c8] : memref<98xf32, #tpu.memory_space<smem>>
      %102 = vector.broadcast %101 : f32 to vector<2x256xf32>
      %103 = arith.mulf %44, %102 : vector<2x256xf32>
      %104 = arith.addf %100, %103 : vector<2x256xf32>
      %c15 = arith.constant 15 : index
      %105 = memref.load %arg2[%c15] : memref<98xf32, #tpu.memory_space<smem>>
      %106 = vector.broadcast %105 : f32 to vector<2x256xf32>
      %107 = arith.mulf %49, %106 : vector<2x256xf32>
      %108 = arith.addf %104, %107 : vector<2x256xf32>
      %c22 = arith.constant 22 : index
      %109 = memref.load %arg2[%c22] : memref<98xf32, #tpu.memory_space<smem>>
      %110 = vector.broadcast %109 : f32 to vector<2x256xf32>
      %111 = arith.mulf %12, %110 : vector<2x256xf32>
      %112 = arith.addf %108, %111 : vector<2x256xf32>
      %c29 = arith.constant 29 : index
      %113 = memref.load %arg2[%c29] : memref<98xf32, #tpu.memory_space<smem>>
      %114 = vector.broadcast %113 : f32 to vector<2x256xf32>
      %115 = arith.mulf %54, %114 : vector<2x256xf32>
      %116 = arith.addf %112, %115 : vector<2x256xf32>
      %c36 = arith.constant 36 : index
      %117 = memref.load %arg2[%c36] : memref<98xf32, #tpu.memory_space<smem>>
      %118 = vector.broadcast %117 : f32 to vector<2x256xf32>
      %119 = arith.mulf %59, %118 : vector<2x256xf32>
      %120 = arith.addf %116, %119 : vector<2x256xf32>
      %c43 = arith.constant 43 : index
      %121 = memref.load %arg2[%c43] : memref<98xf32, #tpu.memory_space<smem>>
      %122 = vector.broadcast %121 : f32 to vector<2x256xf32>
      %123 = arith.mulf %64, %122 : vector<2x256xf32>
      %124 = arith.addf %120, %123 : vector<2x256xf32>
      %c2_i32 = arith.constant 2 : i32
      %125 = tpu.dynamic_rotate %124 by %c2_i32 dim 1 : vector<2x256xf32>, i32 -> vector<2x256xf32>
      %c2_i32_34 = arith.constant 2 : i32
      %126 = vector.broadcast %c2_i32_34 : i32 to vector<2x256xi32>
      %127 = arith.cmpi sge, %32, %126 : vector<2x256xi32>
      %cst_35 = arith.constant 0.000000e+00 : f32
      %128 = vector.broadcast %cst_35 : f32 to vector<2x256xf32>
      %129 = arith.select %127, %125, %128 : vector<2x256xi1>, vector<2x256xf32>
      %130 = arith.addf %97, %129 : vector<2x256xf32>
      %c2 = arith.constant 2 : index
      %131 = memref.load %arg2[%c2] : memref<98xf32, #tpu.memory_space<smem>>
      %132 = vector.broadcast %131 : f32 to vector<2x256xf32>
      %133 = arith.mulf %39, %132 : vector<2x256xf32>
      %c9 = arith.constant 9 : index
      %134 = memref.load %arg2[%c9] : memref<98xf32, #tpu.memory_space<smem>>
      %135 = vector.broadcast %134 : f32 to vector<2x256xf32>
      %136 = arith.mulf %44, %135 : vector<2x256xf32>
      %137 = arith.addf %133, %136 : vector<2x256xf32>
      %c16 = arith.constant 16 : index
      %138 = memref.load %arg2[%c16] : memref<98xf32, #tpu.memory_space<smem>>
      %139 = vector.broadcast %138 : f32 to vector<2x256xf32>
      %140 = arith.mulf %49, %139 : vector<2x256xf32>
      %141 = arith.addf %137, %140 : vector<2x256xf32>
      %c23 = arith.constant 23 : index
      %142 = memref.load %arg2[%c23] : memref<98xf32, #tpu.memory_space<smem>>
      %143 = vector.broadcast %142 : f32 to vector<2x256xf32>
      %144 = arith.mulf %12, %143 : vector<2x256xf32>
      %145 = arith.addf %141, %144 : vector<2x256xf32>
      %c30 = arith.constant 30 : index
      %146 = memref.load %arg2[%c30] : memref<98xf32, #tpu.memory_space<smem>>
      %147 = vector.broadcast %146 : f32 to vector<2x256xf32>
      %148 = arith.mulf %54, %147 : vector<2x256xf32>
      %149 = arith.addf %145, %148 : vector<2x256xf32>
      %c37 = arith.constant 37 : index
      %150 = memref.load %arg2[%c37] : memref<98xf32, #tpu.memory_space<smem>>
      %151 = vector.broadcast %150 : f32 to vector<2x256xf32>
      %152 = arith.mulf %59, %151 : vector<2x256xf32>
      %153 = arith.addf %149, %152 : vector<2x256xf32>
      %c44 = arith.constant 44 : index
      %154 = memref.load %arg2[%c44] : memref<98xf32, #tpu.memory_space<smem>>
      %155 = vector.broadcast %154 : f32 to vector<2x256xf32>
      %156 = arith.mulf %64, %155 : vector<2x256xf32>
      %157 = arith.addf %153, %156 : vector<2x256xf32>
      %c1_i32_36 = arith.constant 1 : i32
      %158 = tpu.dynamic_rotate %157 by %c1_i32_36 dim 1 : vector<2x256xf32>, i32 -> vector<2x256xf32>
      %c1_i32_37 = arith.constant 1 : i32
      %159 = vector.broadcast %c1_i32_37 : i32 to vector<2x256xi32>
      %160 = arith.cmpi sge, %32, %159 : vector<2x256xi32>
      %cst_38 = arith.constant 0.000000e+00 : f32
      %161 = vector.broadcast %cst_38 : f32 to vector<2x256xf32>
      %162 = arith.select %160, %158, %161 : vector<2x256xi1>, vector<2x256xf32>
      %163 = arith.addf %130, %162 : vector<2x256xf32>
      %c3 = arith.constant 3 : index
      %164 = memref.load %arg2[%c3] : memref<98xf32, #tpu.memory_space<smem>>
      %165 = vector.broadcast %164 : f32 to vector<2x256xf32>
      %166 = arith.mulf %39, %165 : vector<2x256xf32>
      %c10 = arith.constant 10 : index
      %167 = memref.load %arg2[%c10] : memref<98xf32, #tpu.memory_space<smem>>
      %168 = vector.broadcast %167 : f32 to vector<2x256xf32>
      %169 = arith.mulf %44, %168 : vector<2x256xf32>
      %170 = arith.addf %166, %169 : vector<2x256xf32>
      %c17 = arith.constant 17 : index
      %171 = memref.load %arg2[%c17] : memref<98xf32, #tpu.memory_space<smem>>
      %172 = vector.broadcast %171 : f32 to vector<2x256xf32>
      %173 = arith.mulf %49, %172 : vector<2x256xf32>
      %174 = arith.addf %170, %173 : vector<2x256xf32>
      %c24 = arith.constant 24 : index
      %175 = memref.load %arg2[%c24] : memref<98xf32, #tpu.memory_space<smem>>
      %176 = vector.broadcast %175 : f32 to vector<2x256xf32>
      %177 = arith.mulf %12, %176 : vector<2x256xf32>
      %178 = arith.addf %174, %177 : vector<2x256xf32>
      %c31 = arith.constant 31 : index
      %179 = memref.load %arg2[%c31] : memref<98xf32, #tpu.memory_space<smem>>
      %180 = vector.broadcast %179 : f32 to vector<2x256xf32>
      %181 = arith.mulf %54, %180 : vector<2x256xf32>
      %182 = arith.addf %178, %181 : vector<2x256xf32>
      %c38 = arith.constant 38 : index
      %183 = memref.load %arg2[%c38] : memref<98xf32, #tpu.memory_space<smem>>
      %184 = vector.broadcast %183 : f32 to vector<2x256xf32>
      %185 = arith.mulf %59, %184 : vector<2x256xf32>
      %186 = arith.addf %182, %185 : vector<2x256xf32>
      %c45 = arith.constant 45 : index
      %187 = memref.load %arg2[%c45] : memref<98xf32, #tpu.memory_space<smem>>
      %188 = vector.broadcast %187 : f32 to vector<2x256xf32>
      %189 = arith.mulf %64, %188 : vector<2x256xf32>
      %190 = arith.addf %186, %189 : vector<2x256xf32>
      %191 = arith.addf %163, %190 : vector<2x256xf32>
      %c4 = arith.constant 4 : index
      %192 = memref.load %arg2[%c4] : memref<98xf32, #tpu.memory_space<smem>>
      %193 = vector.broadcast %192 : f32 to vector<2x256xf32>
      %194 = arith.mulf %39, %193 : vector<2x256xf32>
      %c11 = arith.constant 11 : index
      %195 = memref.load %arg2[%c11] : memref<98xf32, #tpu.memory_space<smem>>
      %196 = vector.broadcast %195 : f32 to vector<2x256xf32>
      %197 = arith.mulf %44, %196 : vector<2x256xf32>
      %198 = arith.addf %194, %197 : vector<2x256xf32>
      %c18 = arith.constant 18 : index
      %199 = memref.load %arg2[%c18] : memref<98xf32, #tpu.memory_space<smem>>
      %200 = vector.broadcast %199 : f32 to vector<2x256xf32>
      %201 = arith.mulf %49, %200 : vector<2x256xf32>
      %202 = arith.addf %198, %201 : vector<2x256xf32>
      %c25 = arith.constant 25 : index
      %203 = memref.load %arg2[%c25] : memref<98xf32, #tpu.memory_space<smem>>
      %204 = vector.broadcast %203 : f32 to vector<2x256xf32>
      %205 = arith.mulf %12, %204 : vector<2x256xf32>
      %206 = arith.addf %202, %205 : vector<2x256xf32>
      %c32 = arith.constant 32 : index
      %207 = memref.load %arg2[%c32] : memref<98xf32, #tpu.memory_space<smem>>
      %208 = vector.broadcast %207 : f32 to vector<2x256xf32>
      %209 = arith.mulf %54, %208 : vector<2x256xf32>
      %210 = arith.addf %206, %209 : vector<2x256xf32>
      %c39 = arith.constant 39 : index
      %211 = memref.load %arg2[%c39] : memref<98xf32, #tpu.memory_space<smem>>
      %212 = vector.broadcast %211 : f32 to vector<2x256xf32>
      %213 = arith.mulf %59, %212 : vector<2x256xf32>
      %214 = arith.addf %210, %213 : vector<2x256xf32>
      %c46 = arith.constant 46 : index
      %215 = memref.load %arg2[%c46] : memref<98xf32, #tpu.memory_space<smem>>
      %216 = vector.broadcast %215 : f32 to vector<2x256xf32>
      %217 = arith.mulf %64, %216 : vector<2x256xf32>
      %218 = arith.addf %214, %217 : vector<2x256xf32>
      %c255_i32 = arith.constant 255 : i32
      %219 = tpu.dynamic_rotate %218 by %c255_i32 dim 1 : vector<2x256xf32>, i32 -> vector<2x256xf32>
      %c15_i32 = arith.constant 15 : i32
      %220 = vector.broadcast %c15_i32 : i32 to vector<2x256xi32>
      %221 = arith.cmpi slt, %32, %220 : vector<2x256xi32>
      %cst_39 = arith.constant 0.000000e+00 : f32
      %222 = vector.broadcast %cst_39 : f32 to vector<2x256xf32>
      %223 = arith.select %221, %219, %222 : vector<2x256xi1>, vector<2x256xf32>
      %224 = arith.addf %191, %223 : vector<2x256xf32>
      %c5 = arith.constant 5 : index
      %225 = memref.load %arg2[%c5] : memref<98xf32, #tpu.memory_space<smem>>
      %226 = vector.broadcast %225 : f32 to vector<2x256xf32>
      %227 = arith.mulf %39, %226 : vector<2x256xf32>
      %c12 = arith.constant 12 : index
      %228 = memref.load %arg2[%c12] : memref<98xf32, #tpu.memory_space<smem>>
      %229 = vector.broadcast %228 : f32 to vector<2x256xf32>
      %230 = arith.mulf %44, %229 : vector<2x256xf32>
      %231 = arith.addf %227, %230 : vector<2x256xf32>
      %c19 = arith.constant 19 : index
      %232 = memref.load %arg2[%c19] : memref<98xf32, #tpu.memory_space<smem>>
      %233 = vector.broadcast %232 : f32 to vector<2x256xf32>
      %234 = arith.mulf %49, %233 : vector<2x256xf32>
      %235 = arith.addf %231, %234 : vector<2x256xf32>
      %c26 = arith.constant 26 : index
      %236 = memref.load %arg2[%c26] : memref<98xf32, #tpu.memory_space<smem>>
      %237 = vector.broadcast %236 : f32 to vector<2x256xf32>
      %238 = arith.mulf %12, %237 : vector<2x256xf32>
      %239 = arith.addf %235, %238 : vector<2x256xf32>
      %c33 = arith.constant 33 : index
      %240 = memref.load %arg2[%c33] : memref<98xf32, #tpu.memory_space<smem>>
      %241 = vector.broadcast %240 : f32 to vector<2x256xf32>
      %242 = arith.mulf %54, %241 : vector<2x256xf32>
      %243 = arith.addf %239, %242 : vector<2x256xf32>
      %c40 = arith.constant 40 : index
      %244 = memref.load %arg2[%c40] : memref<98xf32, #tpu.memory_space<smem>>
      %245 = vector.broadcast %244 : f32 to vector<2x256xf32>
      %246 = arith.mulf %59, %245 : vector<2x256xf32>
      %247 = arith.addf %243, %246 : vector<2x256xf32>
      %c47 = arith.constant 47 : index
      %248 = memref.load %arg2[%c47] : memref<98xf32, #tpu.memory_space<smem>>
      %249 = vector.broadcast %248 : f32 to vector<2x256xf32>
      %250 = arith.mulf %64, %249 : vector<2x256xf32>
      %251 = arith.addf %247, %250 : vector<2x256xf32>
      %c254_i32 = arith.constant 254 : i32
      %252 = tpu.dynamic_rotate %251 by %c254_i32 dim 1 : vector<2x256xf32>, i32 -> vector<2x256xf32>
      %c14_i32 = arith.constant 14 : i32
      %253 = vector.broadcast %c14_i32 : i32 to vector<2x256xi32>
      %254 = arith.cmpi slt, %32, %253 : vector<2x256xi32>
      %cst_40 = arith.constant 0.000000e+00 : f32
      %255 = vector.broadcast %cst_40 : f32 to vector<2x256xf32>
      %256 = arith.select %254, %252, %255 : vector<2x256xi1>, vector<2x256xf32>
      %257 = arith.addf %224, %256 : vector<2x256xf32>
      %c6 = arith.constant 6 : index
      %258 = memref.load %arg2[%c6] : memref<98xf32, #tpu.memory_space<smem>>
      %259 = vector.broadcast %258 : f32 to vector<2x256xf32>
      %260 = arith.mulf %39, %259 : vector<2x256xf32>
      %c13 = arith.constant 13 : index
      %261 = memref.load %arg2[%c13] : memref<98xf32, #tpu.memory_space<smem>>
      %262 = vector.broadcast %261 : f32 to vector<2x256xf32>
      %263 = arith.mulf %44, %262 : vector<2x256xf32>
      %264 = arith.addf %260, %263 : vector<2x256xf32>
      %c20 = arith.constant 20 : index
      %265 = memref.load %arg2[%c20] : memref<98xf32, #tpu.memory_space<smem>>
      %266 = vector.broadcast %265 : f32 to vector<2x256xf32>
      %267 = arith.mulf %49, %266 : vector<2x256xf32>
      %268 = arith.addf %264, %267 : vector<2x256xf32>
      %c27 = arith.constant 27 : index
      %269 = memref.load %arg2[%c27] : memref<98xf32, #tpu.memory_space<smem>>
      %270 = vector.broadcast %269 : f32 to vector<2x256xf32>
      %271 = arith.mulf %12, %270 : vector<2x256xf32>
      %272 = arith.addf %268, %271 : vector<2x256xf32>
      %c34 = arith.constant 34 : index
      %273 = memref.load %arg2[%c34] : memref<98xf32, #tpu.memory_space<smem>>
      %274 = vector.broadcast %273 : f32 to vector<2x256xf32>
      %275 = arith.mulf %54, %274 : vector<2x256xf32>
      %276 = arith.addf %272, %275 : vector<2x256xf32>
      %c41 = arith.constant 41 : index
      %277 = memref.load %arg2[%c41] : memref<98xf32, #tpu.memory_space<smem>>
      %278 = vector.broadcast %277 : f32 to vector<2x256xf32>
      %279 = arith.mulf %59, %278 : vector<2x256xf32>
      %280 = arith.addf %276, %279 : vector<2x256xf32>
      %c48 = arith.constant 48 : index
      %281 = memref.load %arg2[%c48] : memref<98xf32, #tpu.memory_space<smem>>
      %282 = vector.broadcast %281 : f32 to vector<2x256xf32>
      %283 = arith.mulf %64, %282 : vector<2x256xf32>
      %284 = arith.addf %280, %283 : vector<2x256xf32>
      %c253_i32 = arith.constant 253 : i32
      %285 = tpu.dynamic_rotate %284 by %c253_i32 dim 1 : vector<2x256xf32>, i32 -> vector<2x256xf32>
      %c13_i32 = arith.constant 13 : i32
      %286 = vector.broadcast %c13_i32 : i32 to vector<2x256xi32>
      %287 = arith.cmpi slt, %32, %286 : vector<2x256xi32>
      %cst_41 = arith.constant 0.000000e+00 : f32
      %288 = vector.broadcast %cst_41 : f32 to vector<2x256xf32>
      %289 = arith.select %287, %285, %288 : vector<2x256xi1>, vector<2x256xf32>
      %290 = arith.addf %257, %289 : vector<2x256xf32>
      %c48_i32_42 = arith.constant 48 : i32
      %291 = tpu.dynamic_rotate %15 by %c48_i32_42 dim 1 : vector<2x256xf32>, i32 -> vector<2x256xf32>
      %c48_i32_43 = arith.constant 48 : i32
      %292 = vector.broadcast %c48_i32_43 : i32 to vector<2x256xi32>
      %293 = arith.cmpi sge, %16, %292 : vector<2x256xi32>
      %cst_44 = arith.constant 0.000000e+00 : f32
      %294 = vector.broadcast %cst_44 : f32 to vector<2x256xf32>
      %295 = arith.select %293, %291, %294 : vector<2x256xi1>, vector<2x256xf32>
      %c32_i32_45 = arith.constant 32 : i32
      %296 = tpu.dynamic_rotate %15 by %c32_i32_45 dim 1 : vector<2x256xf32>, i32 -> vector<2x256xf32>
      %c32_i32_46 = arith.constant 32 : i32
      %297 = vector.broadcast %c32_i32_46 : i32 to vector<2x256xi32>
      %298 = arith.cmpi sge, %16, %297 : vector<2x256xi32>
      %cst_47 = arith.constant 0.000000e+00 : f32
      %299 = vector.broadcast %cst_47 : f32 to vector<2x256xf32>
      %300 = arith.select %298, %296, %299 : vector<2x256xi1>, vector<2x256xf32>
      %c16_i32_48 = arith.constant 16 : i32
      %301 = tpu.dynamic_rotate %15 by %c16_i32_48 dim 1 : vector<2x256xf32>, i32 -> vector<2x256xf32>
      %c16_i32_49 = arith.constant 16 : i32
      %302 = vector.broadcast %c16_i32_49 : i32 to vector<2x256xi32>
      %303 = arith.cmpi sge, %16, %302 : vector<2x256xi32>
      %cst_50 = arith.constant 0.000000e+00 : f32
      %304 = vector.broadcast %cst_50 : f32 to vector<2x256xf32>
      %305 = arith.select %303, %301, %304 : vector<2x256xi1>, vector<2x256xf32>
      %c240_i32_51 = arith.constant 240 : i32
      %306 = tpu.dynamic_rotate %15 by %c240_i32_51 dim 1 : vector<2x256xf32>, i32 -> vector<2x256xf32>
      %c240_i32_52 = arith.constant 240 : i32
      %307 = vector.broadcast %c240_i32_52 : i32 to vector<2x256xi32>
      %308 = arith.cmpi slt, %16, %307 : vector<2x256xi32>
      %cst_53 = arith.constant 0.000000e+00 : f32
      %309 = vector.broadcast %cst_53 : f32 to vector<2x256xf32>
      %310 = arith.select %308, %306, %309 : vector<2x256xi1>, vector<2x256xf32>
      %c224_i32_54 = arith.constant 224 : i32
      %311 = tpu.dynamic_rotate %15 by %c224_i32_54 dim 1 : vector<2x256xf32>, i32 -> vector<2x256xf32>
      %c224_i32_55 = arith.constant 224 : i32
      %312 = vector.broadcast %c224_i32_55 : i32 to vector<2x256xi32>
      %313 = arith.cmpi slt, %16, %312 : vector<2x256xi32>
      %cst_56 = arith.constant 0.000000e+00 : f32
      %314 = vector.broadcast %cst_56 : f32 to vector<2x256xf32>
      %315 = arith.select %313, %311, %314 : vector<2x256xi1>, vector<2x256xf32>
      %c208_i32_57 = arith.constant 208 : i32
      %316 = tpu.dynamic_rotate %15 by %c208_i32_57 dim 1 : vector<2x256xf32>, i32 -> vector<2x256xf32>
      %c208_i32_58 = arith.constant 208 : i32
      %317 = vector.broadcast %c208_i32_58 : i32 to vector<2x256xi32>
      %318 = arith.cmpi slt, %16, %317 : vector<2x256xi32>
      %cst_59 = arith.constant 0.000000e+00 : f32
      %319 = vector.broadcast %cst_59 : f32 to vector<2x256xf32>
      %320 = arith.select %318, %316, %319 : vector<2x256xi1>, vector<2x256xf32>
      %c49 = arith.constant 49 : index
      %321 = memref.load %arg2[%c49] : memref<98xf32, #tpu.memory_space<smem>>
      %322 = vector.broadcast %321 : f32 to vector<2x256xf32>
      %323 = arith.mulf %295, %322 : vector<2x256xf32>
      %c56 = arith.constant 56 : index
      %324 = memref.load %arg2[%c56] : memref<98xf32, #tpu.memory_space<smem>>
      %325 = vector.broadcast %324 : f32 to vector<2x256xf32>
      %326 = arith.mulf %300, %325 : vector<2x256xf32>
      %327 = arith.addf %323, %326 : vector<2x256xf32>
      %c63 = arith.constant 63 : index
      %328 = memref.load %arg2[%c63] : memref<98xf32, #tpu.memory_space<smem>>
      %329 = vector.broadcast %328 : f32 to vector<2x256xf32>
      %330 = arith.mulf %305, %329 : vector<2x256xf32>
      %331 = arith.addf %327, %330 : vector<2x256xf32>
      %c70 = arith.constant 70 : index
      %332 = memref.load %arg2[%c70] : memref<98xf32, #tpu.memory_space<smem>>
      %333 = vector.broadcast %332 : f32 to vector<2x256xf32>
      %334 = arith.mulf %15, %333 : vector<2x256xf32>
      %335 = arith.addf %331, %334 : vector<2x256xf32>
      %c77 = arith.constant 77 : index
      %336 = memref.load %arg2[%c77] : memref<98xf32, #tpu.memory_space<smem>>
      %337 = vector.broadcast %336 : f32 to vector<2x256xf32>
      %338 = arith.mulf %310, %337 : vector<2x256xf32>
      %339 = arith.addf %335, %338 : vector<2x256xf32>
      %c84 = arith.constant 84 : index
      %340 = memref.load %arg2[%c84] : memref<98xf32, #tpu.memory_space<smem>>
      %341 = vector.broadcast %340 : f32 to vector<2x256xf32>
      %342 = arith.mulf %315, %341 : vector<2x256xf32>
      %343 = arith.addf %339, %342 : vector<2x256xf32>
      %c91 = arith.constant 91 : index
      %344 = memref.load %arg2[%c91] : memref<98xf32, #tpu.memory_space<smem>>
      %345 = vector.broadcast %344 : f32 to vector<2x256xf32>
      %346 = arith.mulf %320, %345 : vector<2x256xf32>
      %347 = arith.addf %343, %346 : vector<2x256xf32>
      %c3_i32_60 = arith.constant 3 : i32
      %348 = tpu.dynamic_rotate %347 by %c3_i32_60 dim 1 : vector<2x256xf32>, i32 -> vector<2x256xf32>
      %c3_i32_61 = arith.constant 3 : i32
      %349 = vector.broadcast %c3_i32_61 : i32 to vector<2x256xi32>
      %350 = arith.cmpi sge, %32, %349 : vector<2x256xi32>
      %cst_62 = arith.constant 0.000000e+00 : f32
      %351 = vector.broadcast %cst_62 : f32 to vector<2x256xf32>
      %352 = arith.select %350, %348, %351 : vector<2x256xi1>, vector<2x256xf32>
      %353 = arith.addf %290, %352 : vector<2x256xf32>
      %c50 = arith.constant 50 : index
      %354 = memref.load %arg2[%c50] : memref<98xf32, #tpu.memory_space<smem>>
      %355 = vector.broadcast %354 : f32 to vector<2x256xf32>
      %356 = arith.mulf %295, %355 : vector<2x256xf32>
      %c57 = arith.constant 57 : index
      %357 = memref.load %arg2[%c57] : memref<98xf32, #tpu.memory_space<smem>>
      %358 = vector.broadcast %357 : f32 to vector<2x256xf32>
      %359 = arith.mulf %300, %358 : vector<2x256xf32>
      %360 = arith.addf %356, %359 : vector<2x256xf32>
      %c64 = arith.constant 64 : index
      %361 = memref.load %arg2[%c64] : memref<98xf32, #tpu.memory_space<smem>>
      %362 = vector.broadcast %361 : f32 to vector<2x256xf32>
      %363 = arith.mulf %305, %362 : vector<2x256xf32>
      %364 = arith.addf %360, %363 : vector<2x256xf32>
      %c71 = arith.constant 71 : index
      %365 = memref.load %arg2[%c71] : memref<98xf32, #tpu.memory_space<smem>>
      %366 = vector.broadcast %365 : f32 to vector<2x256xf32>
      %367 = arith.mulf %15, %366 : vector<2x256xf32>
      %368 = arith.addf %364, %367 : vector<2x256xf32>
      %c78 = arith.constant 78 : index
      %369 = memref.load %arg2[%c78] : memref<98xf32, #tpu.memory_space<smem>>
      %370 = vector.broadcast %369 : f32 to vector<2x256xf32>
      %371 = arith.mulf %310, %370 : vector<2x256xf32>
      %372 = arith.addf %368, %371 : vector<2x256xf32>
      %c85 = arith.constant 85 : index
      %373 = memref.load %arg2[%c85] : memref<98xf32, #tpu.memory_space<smem>>
      %374 = vector.broadcast %373 : f32 to vector<2x256xf32>
      %375 = arith.mulf %315, %374 : vector<2x256xf32>
      %376 = arith.addf %372, %375 : vector<2x256xf32>
      %c92 = arith.constant 92 : index
      %377 = memref.load %arg2[%c92] : memref<98xf32, #tpu.memory_space<smem>>
      %378 = vector.broadcast %377 : f32 to vector<2x256xf32>
      %379 = arith.mulf %320, %378 : vector<2x256xf32>
      %380 = arith.addf %376, %379 : vector<2x256xf32>
      %c2_i32_63 = arith.constant 2 : i32
      %381 = tpu.dynamic_rotate %380 by %c2_i32_63 dim 1 : vector<2x256xf32>, i32 -> vector<2x256xf32>
      %c2_i32_64 = arith.constant 2 : i32
      %382 = vector.broadcast %c2_i32_64 : i32 to vector<2x256xi32>
      %383 = arith.cmpi sge, %32, %382 : vector<2x256xi32>
      %cst_65 = arith.constant 0.000000e+00 : f32
      %384 = vector.broadcast %cst_65 : f32 to vector<2x256xf32>
      %385 = arith.select %383, %381, %384 : vector<2x256xi1>, vector<2x256xf32>
      %386 = arith.addf %353, %385 : vector<2x256xf32>
      %c51 = arith.constant 51 : index
      %387 = memref.load %arg2[%c51] : memref<98xf32, #tpu.memory_space<smem>>
      %388 = vector.broadcast %387 : f32 to vector<2x256xf32>
      %389 = arith.mulf %295, %388 : vector<2x256xf32>
      %c58 = arith.constant 58 : index
      %390 = memref.load %arg2[%c58] : memref<98xf32, #tpu.memory_space<smem>>
      %391 = vector.broadcast %390 : f32 to vector<2x256xf32>
      %392 = arith.mulf %300, %391 : vector<2x256xf32>
      %393 = arith.addf %389, %392 : vector<2x256xf32>
      %c65 = arith.constant 65 : index
      %394 = memref.load %arg2[%c65] : memref<98xf32, #tpu.memory_space<smem>>
      %395 = vector.broadcast %394 : f32 to vector<2x256xf32>
      %396 = arith.mulf %305, %395 : vector<2x256xf32>
      %397 = arith.addf %393, %396 : vector<2x256xf32>
      %c72 = arith.constant 72 : index
      %398 = memref.load %arg2[%c72] : memref<98xf32, #tpu.memory_space<smem>>
      %399 = vector.broadcast %398 : f32 to vector<2x256xf32>
      %400 = arith.mulf %15, %399 : vector<2x256xf32>
      %401 = arith.addf %397, %400 : vector<2x256xf32>
      %c79 = arith.constant 79 : index
      %402 = memref.load %arg2[%c79] : memref<98xf32, #tpu.memory_space<smem>>
      %403 = vector.broadcast %402 : f32 to vector<2x256xf32>
      %404 = arith.mulf %310, %403 : vector<2x256xf32>
      %405 = arith.addf %401, %404 : vector<2x256xf32>
      %c86 = arith.constant 86 : index
      %406 = memref.load %arg2[%c86] : memref<98xf32, #tpu.memory_space<smem>>
      %407 = vector.broadcast %406 : f32 to vector<2x256xf32>
      %408 = arith.mulf %315, %407 : vector<2x256xf32>
      %409 = arith.addf %405, %408 : vector<2x256xf32>
      %c93 = arith.constant 93 : index
      %410 = memref.load %arg2[%c93] : memref<98xf32, #tpu.memory_space<smem>>
      %411 = vector.broadcast %410 : f32 to vector<2x256xf32>
      %412 = arith.mulf %320, %411 : vector<2x256xf32>
      %413 = arith.addf %409, %412 : vector<2x256xf32>
      %c1_i32_66 = arith.constant 1 : i32
      %414 = tpu.dynamic_rotate %413 by %c1_i32_66 dim 1 : vector<2x256xf32>, i32 -> vector<2x256xf32>
      %c1_i32_67 = arith.constant 1 : i32
      %415 = vector.broadcast %c1_i32_67 : i32 to vector<2x256xi32>
      %416 = arith.cmpi sge, %32, %415 : vector<2x256xi32>
      %cst_68 = arith.constant 0.000000e+00 : f32
      %417 = vector.broadcast %cst_68 : f32 to vector<2x256xf32>
      %418 = arith.select %416, %414, %417 : vector<2x256xi1>, vector<2x256xf32>
      %419 = arith.addf %386, %418 : vector<2x256xf32>
      %c52 = arith.constant 52 : index
      %420 = memref.load %arg2[%c52] : memref<98xf32, #tpu.memory_space<smem>>
      %421 = vector.broadcast %420 : f32 to vector<2x256xf32>
      %422 = arith.mulf %295, %421 : vector<2x256xf32>
      %c59 = arith.constant 59 : index
      %423 = memref.load %arg2[%c59] : memref<98xf32, #tpu.memory_space<smem>>
      %424 = vector.broadcast %423 : f32 to vector<2x256xf32>
      %425 = arith.mulf %300, %424 : vector<2x256xf32>
      %426 = arith.addf %422, %425 : vector<2x256xf32>
      %c66 = arith.constant 66 : index
      %427 = memref.load %arg2[%c66] : memref<98xf32, #tpu.memory_space<smem>>
      %428 = vector.broadcast %427 : f32 to vector<2x256xf32>
      %429 = arith.mulf %305, %428 : vector<2x256xf32>
      %430 = arith.addf %426, %429 : vector<2x256xf32>
      %c73 = arith.constant 73 : index
      %431 = memref.load %arg2[%c73] : memref<98xf32, #tpu.memory_space<smem>>
      %432 = vector.broadcast %431 : f32 to vector<2x256xf32>
      %433 = arith.mulf %15, %432 : vector<2x256xf32>
      %434 = arith.addf %430, %433 : vector<2x256xf32>
      %c80 = arith.constant 80 : index
      %435 = memref.load %arg2[%c80] : memref<98xf32, #tpu.memory_space<smem>>
      %436 = vector.broadcast %435 : f32 to vector<2x256xf32>
      %437 = arith.mulf %310, %436 : vector<2x256xf32>
      %438 = arith.addf %434, %437 : vector<2x256xf32>
      %c87 = arith.constant 87 : index
      %439 = memref.load %arg2[%c87] : memref<98xf32, #tpu.memory_space<smem>>
      %440 = vector.broadcast %439 : f32 to vector<2x256xf32>
      %441 = arith.mulf %315, %440 : vector<2x256xf32>
      %442 = arith.addf %438, %441 : vector<2x256xf32>
      %c94 = arith.constant 94 : index
      %443 = memref.load %arg2[%c94] : memref<98xf32, #tpu.memory_space<smem>>
      %444 = vector.broadcast %443 : f32 to vector<2x256xf32>
      %445 = arith.mulf %320, %444 : vector<2x256xf32>
      %446 = arith.addf %442, %445 : vector<2x256xf32>
      %447 = arith.addf %419, %446 : vector<2x256xf32>
      %c53 = arith.constant 53 : index
      %448 = memref.load %arg2[%c53] : memref<98xf32, #tpu.memory_space<smem>>
      %449 = vector.broadcast %448 : f32 to vector<2x256xf32>
      %450 = arith.mulf %295, %449 : vector<2x256xf32>
      %c60 = arith.constant 60 : index
      %451 = memref.load %arg2[%c60] : memref<98xf32, #tpu.memory_space<smem>>
      %452 = vector.broadcast %451 : f32 to vector<2x256xf32>
      %453 = arith.mulf %300, %452 : vector<2x256xf32>
      %454 = arith.addf %450, %453 : vector<2x256xf32>
      %c67 = arith.constant 67 : index
      %455 = memref.load %arg2[%c67] : memref<98xf32, #tpu.memory_space<smem>>
      %456 = vector.broadcast %455 : f32 to vector<2x256xf32>
      %457 = arith.mulf %305, %456 : vector<2x256xf32>
      %458 = arith.addf %454, %457 : vector<2x256xf32>
      %c74 = arith.constant 74 : index
      %459 = memref.load %arg2[%c74] : memref<98xf32, #tpu.memory_space<smem>>
      %460 = vector.broadcast %459 : f32 to vector<2x256xf32>
      %461 = arith.mulf %15, %460 : vector<2x256xf32>
      %462 = arith.addf %458, %461 : vector<2x256xf32>
      %c81 = arith.constant 81 : index
      %463 = memref.load %arg2[%c81] : memref<98xf32, #tpu.memory_space<smem>>
      %464 = vector.broadcast %463 : f32 to vector<2x256xf32>
      %465 = arith.mulf %310, %464 : vector<2x256xf32>
      %466 = arith.addf %462, %465 : vector<2x256xf32>
      %c88 = arith.constant 88 : index
      %467 = memref.load %arg2[%c88] : memref<98xf32, #tpu.memory_space<smem>>
      %468 = vector.broadcast %467 : f32 to vector<2x256xf32>
      %469 = arith.mulf %315, %468 : vector<2x256xf32>
      %470 = arith.addf %466, %469 : vector<2x256xf32>
      %c95 = arith.constant 95 : index
      %471 = memref.load %arg2[%c95] : memref<98xf32, #tpu.memory_space<smem>>
      %472 = vector.broadcast %471 : f32 to vector<2x256xf32>
      %473 = arith.mulf %320, %472 : vector<2x256xf32>
      %474 = arith.addf %470, %473 : vector<2x256xf32>
      %c255_i32_69 = arith.constant 255 : i32
      %475 = tpu.dynamic_rotate %474 by %c255_i32_69 dim 1 : vector<2x256xf32>, i32 -> vector<2x256xf32>
      %c15_i32_70 = arith.constant 15 : i32
      %476 = vector.broadcast %c15_i32_70 : i32 to vector<2x256xi32>
      %477 = arith.cmpi slt, %32, %476 : vector<2x256xi32>
      %cst_71 = arith.constant 0.000000e+00 : f32
      %478 = vector.broadcast %cst_71 : f32 to vector<2x256xf32>
      %479 = arith.select %477, %475, %478 : vector<2x256xi1>, vector<2x256xf32>
      %480 = arith.addf %447, %479 : vector<2x256xf32>
      %c54 = arith.constant 54 : index
      %481 = memref.load %arg2[%c54] : memref<98xf32, #tpu.memory_space<smem>>
      %482 = vector.broadcast %481 : f32 to vector<2x256xf32>
      %483 = arith.mulf %295, %482 : vector<2x256xf32>
      %c61 = arith.constant 61 : index
      %484 = memref.load %arg2[%c61] : memref<98xf32, #tpu.memory_space<smem>>
      %485 = vector.broadcast %484 : f32 to vector<2x256xf32>
      %486 = arith.mulf %300, %485 : vector<2x256xf32>
      %487 = arith.addf %483, %486 : vector<2x256xf32>
      %c68 = arith.constant 68 : index
      %488 = memref.load %arg2[%c68] : memref<98xf32, #tpu.memory_space<smem>>
      %489 = vector.broadcast %488 : f32 to vector<2x256xf32>
      %490 = arith.mulf %305, %489 : vector<2x256xf32>
      %491 = arith.addf %487, %490 : vector<2x256xf32>
      %c75 = arith.constant 75 : index
      %492 = memref.load %arg2[%c75] : memref<98xf32, #tpu.memory_space<smem>>
      %493 = vector.broadcast %492 : f32 to vector<2x256xf32>
      %494 = arith.mulf %15, %493 : vector<2x256xf32>
      %495 = arith.addf %491, %494 : vector<2x256xf32>
      %c82 = arith.constant 82 : index
      %496 = memref.load %arg2[%c82] : memref<98xf32, #tpu.memory_space<smem>>
      %497 = vector.broadcast %496 : f32 to vector<2x256xf32>
      %498 = arith.mulf %310, %497 : vector<2x256xf32>
      %499 = arith.addf %495, %498 : vector<2x256xf32>
      %c89 = arith.constant 89 : index
      %500 = memref.load %arg2[%c89] : memref<98xf32, #tpu.memory_space<smem>>
      %501 = vector.broadcast %500 : f32 to vector<2x256xf32>
      %502 = arith.mulf %315, %501 : vector<2x256xf32>
      %503 = arith.addf %499, %502 : vector<2x256xf32>
      %c96 = arith.constant 96 : index
      %504 = memref.load %arg2[%c96] : memref<98xf32, #tpu.memory_space<smem>>
      %505 = vector.broadcast %504 : f32 to vector<2x256xf32>
      %506 = arith.mulf %320, %505 : vector<2x256xf32>
      %507 = arith.addf %503, %506 : vector<2x256xf32>
      %c254_i32_72 = arith.constant 254 : i32
      %508 = tpu.dynamic_rotate %507 by %c254_i32_72 dim 1 : vector<2x256xf32>, i32 -> vector<2x256xf32>
      %c14_i32_73 = arith.constant 14 : i32
      %509 = vector.broadcast %c14_i32_73 : i32 to vector<2x256xi32>
      %510 = arith.cmpi slt, %32, %509 : vector<2x256xi32>
      %cst_74 = arith.constant 0.000000e+00 : f32
      %511 = vector.broadcast %cst_74 : f32 to vector<2x256xf32>
      %512 = arith.select %510, %508, %511 : vector<2x256xi1>, vector<2x256xf32>
      %513 = arith.addf %480, %512 : vector<2x256xf32>
      %c55 = arith.constant 55 : index
      %514 = memref.load %arg2[%c55] : memref<98xf32, #tpu.memory_space<smem>>
      %515 = vector.broadcast %514 : f32 to vector<2x256xf32>
      %516 = arith.mulf %295, %515 : vector<2x256xf32>
      %c62 = arith.constant 62 : index
      %517 = memref.load %arg2[%c62] : memref<98xf32, #tpu.memory_space<smem>>
      %518 = vector.broadcast %517 : f32 to vector<2x256xf32>
      %519 = arith.mulf %300, %518 : vector<2x256xf32>
      %520 = arith.addf %516, %519 : vector<2x256xf32>
      %c69 = arith.constant 69 : index
      %521 = memref.load %arg2[%c69] : memref<98xf32, #tpu.memory_space<smem>>
      %522 = vector.broadcast %521 : f32 to vector<2x256xf32>
      %523 = arith.mulf %305, %522 : vector<2x256xf32>
      %524 = arith.addf %520, %523 : vector<2x256xf32>
      %c76 = arith.constant 76 : index
      %525 = memref.load %arg2[%c76] : memref<98xf32, #tpu.memory_space<smem>>
      %526 = vector.broadcast %525 : f32 to vector<2x256xf32>
      %527 = arith.mulf %15, %526 : vector<2x256xf32>
      %528 = arith.addf %524, %527 : vector<2x256xf32>
      %c83 = arith.constant 83 : index
      %529 = memref.load %arg2[%c83] : memref<98xf32, #tpu.memory_space<smem>>
      %530 = vector.broadcast %529 : f32 to vector<2x256xf32>
      %531 = arith.mulf %310, %530 : vector<2x256xf32>
      %532 = arith.addf %528, %531 : vector<2x256xf32>
      %c90 = arith.constant 90 : index
      %533 = memref.load %arg2[%c90] : memref<98xf32, #tpu.memory_space<smem>>
      %534 = vector.broadcast %533 : f32 to vector<2x256xf32>
      %535 = arith.mulf %315, %534 : vector<2x256xf32>
      %536 = arith.addf %532, %535 : vector<2x256xf32>
      %c97 = arith.constant 97 : index
      %537 = memref.load %arg2[%c97] : memref<98xf32, #tpu.memory_space<smem>>
      %538 = vector.broadcast %537 : f32 to vector<2x256xf32>
      %539 = arith.mulf %320, %538 : vector<2x256xf32>
      %540 = arith.addf %536, %539 : vector<2x256xf32>
      %c253_i32_75 = arith.constant 253 : i32
      %541 = tpu.dynamic_rotate %540 by %c253_i32_75 dim 1 : vector<2x256xf32>, i32 -> vector<2x256xf32>
      %c13_i32_76 = arith.constant 13 : i32
      %542 = vector.broadcast %c13_i32_76 : i32 to vector<2x256xi32>
      %543 = arith.cmpi slt, %32, %542 : vector<2x256xi32>
      %cst_77 = arith.constant 0.000000e+00 : f32
      %544 = vector.broadcast %cst_77 : f32 to vector<2x256xf32>
      %545 = arith.select %543, %541, %544 : vector<2x256xi1>, vector<2x256xf32>
      %546 = arith.addf %513, %545 : vector<2x256xf32>
      %cst_78 = arith.constant 0.000000e+00 : f32
      %547 = vector.broadcast %cst_78 : f32 to vector<2x256xf32>
      %548 = arith.subf %547, %546 : vector<2x256xf32>
      %549 = math.exp %548 : vector<2x256xf32>
      %cst_79 = arith.constant 1.000000e+00 : f32
      %550 = vector.broadcast %cst_79 : f32 to vector<2x256xf32>
      %551 = arith.addf %550, %549 : vector<2x256xf32>
      %cst_80 = arith.constant 1.000000e+00 : f32
      %552 = vector.broadcast %cst_80 : f32 to vector<2x256xf32>
      %553 = arith.divf %552, %551 : vector<2x256xf32>
      %c0_81 = arith.constant 0 : index
      %c0_82 = arith.constant 0 : index
      %554 = vector.load %arg5[%c0_81, %c0_82] : memref<2x256xf32, #tpu.memory_space<vmem>>, vector<2x256xf32>
      tpu.vector_store %arg5[%c0_81, %c0_82], %553 {strides = array<i32>} : memref<2x256xf32, #tpu.memory_space<vmem>>, vector<2x256xf32>,
    } else {
    }
    return
  }
  func.func @transform_0(%arg0: i32, %arg1: i32) -> i32 {
    %c0_i32 = arith.constant 0 : i32
    %c0_i32_0 = arith.constant 0 : i32
    return %c0_i32 : i32
  }
  func.func @transform_1(%arg0: i32, %arg1: i32) -> i32 {
    %c0_i32 = arith.constant 0 : i32
    %c0_i32_0 = arith.constant 0 : i32
    return %c0_i32 : i32
  }
  func.func @transform_2(%arg0: i32, %arg1: i32) -> (i32, i32, i32) {
    %c0_i32 = arith.constant 0 : i32
    %c0_i32_0 = arith.constant 0 : i32
    return %arg0, %arg1, %c0_i32 : i32, i32, i32
  }
  func.func @transform_3(%arg0: i32, %arg1: i32) -> (i32, i32) {
    %c0_i32 = arith.constant 0 : i32
    %c0_i32_0 = arith.constant 0 : i32
    return %arg0, %c0_i32 : i32, i32
  }
}

</mosaic_0001>

<llo_original>
// kernel: tpu_custom_call.1
$region0: #{tpu_custom_call.1}
  #allocation0 [shape = 'u32[]', space=smem, size = 0x4, offset = 0x4, fixed_abs, tag = 'smem constant byte address 0x4 - core index']
  #allocation1 [shape = 'u32[144,128]{1,0:T(1,128)}', space=vmem, size = 0x12000, scoped, tag = 'internal scratch']
  #allocation2 [shape = 'f32[2,256]{1,0:T(2,128)}', space=vmem, size = 0x800, scoped, tag = 'scratch operand']
  #allocation3 [shape = 'f32[2,256]{1,0:T(2,128)}', space=vmem, size = 0x800, scoped, tag = 'scratch operand']
  #allocation4 [shape = 'f32[1]{0:T(128)S(6)}', space=smem, size = 0x200, scoped, tag = 'scoped memory for tpu_custom_call.1']
  %s0 = inlined_call_operand.vmem [shape: f32[98], index: 0, kind: input, shape index: {}]
  %s1 = inlined_call_operand.<no memory space> [shape: f32[1], index: 1, kind: input, shape index: {}]
  %s2 = inlined_call_operand.hbm [shape: f32[2,4,256], index: 2, kind: input, shape index: {}]
  %s3 = inlined_call_operand.hbm [shape: f32[2,256], index: 3, kind: output, shape index: {}]
  %s4 = sld [smem:[#allocation0]]
  $region42: #{tpu_custom_call.1} parent=0
    _
  %s6 = ssub.s32 1, %s4
  %s7 = scalar_select 0, %s6, %s4
  %8 = sst [smem:[#allocation4]] %s1
  $region1: #{tpu_custom_call.1} parent=0
    #allocation5 [shape = 'u8[512]{0}', space=smem, size = 0x200, scoped, tag = 'input window, operand 0, single buffered']
    #allocation6 [shape = 's32[1]{0}', space=sflag, size = 0x4, scoped, tag = 'scoped memory for tpu_custom_call.1']
    #allocation7 [shape = 's32[1]{0}', space=sflag, size = 0x4, scoped, tag = 'scoped memory for tpu_custom_call.1']
    #allocation8 [shape = 's32[1]{0}', space=sflag, size = 0x4, scoped, tag = 'scoped memory for tpu_custom_call.1']
    #allocation9 [shape = 'u8[8192]{0}', space=vmem, size = 0x2000, scoped, tag = 'input window, operand 2, single buffered']
    #allocation10 [shape = 'u8[2048]{0}', space=vmem, size = 0x800, scoped, tag = 'output window, operand 0, single buffered']
    %9 = vsyncpa [#allocation8], 0
    %10 = vsyncpa [#allocation6], 0
    %11 = vsyncpa [#allocation7], 0
    // Predicated region
    $region2: #{tpu_custom_call.1} parent=1 // pred_check
      _
    $region3: #{tpu_custom_call.1} parent=1 // pred_check_branch
      %13 = sbr.rel (0) target = $region5
    $region4: #{tpu_custom_call.1} parent=1 // pred_region
      %s15 = ssub.s32 16, 16
      %16 = vsyncadd [#allocation8], %s15
      %s18 = sshll.u32 %s0, 4
      %s19 = int_to_ptr.vmem [resolvable:$true] %s18
      %21 = dma.vmem_to_smem %s19, 16, [#allocation5], [#allocation8]
    $region5: #{tpu_custom_call.1} parent=1 // pred_fallthru
      _
    // Predicated region
    $region6: #{tpu_custom_call.1} parent=1 // pred_check
      _
    $region7: #{tpu_custom_call.1} parent=1 // pred_check_branch
      %23 = sbr.rel (0) target = $region9
    $region8: #{tpu_custom_call.1} parent=1 // pred_region
      _
    $region9: #{tpu_custom_call.1} parent=1 // pred_fallthru
      _
    // Predicated region
    $region10: #{tpu_custom_call.1} parent=1 // pred_check
      _
    $region11: #{tpu_custom_call.1} parent=1 // pred_check_branch
      %25 = sbr.rel (0) target = $region13
    $region12: #{tpu_custom_call.1} parent=1 // pred_region
      %s27 = ssub.s32 256, 256
      %28 = vsyncadd [#allocation6], %s27
      %s29 = sshll.u32 [#allocation9], 4
      %s30 = int_to_ptr.vmem [resolvable:$true] %s29
      %35 = dma.hbm_to_vmem [thread:$0]  %s2, 256, %s30, [#allocation6], 128, 128, 8
    $region13: #{tpu_custom_call.1} parent=1 // pred_fallthru
      _
    // Predicated region
    $region14: #{tpu_custom_call.1} parent=1 // pred_check
      _
    $region15: #{tpu_custom_call.1} parent=1 // pred_check_branch
      %37 = sbr.rel (0) target = $region17
    $region16: #{tpu_custom_call.1} parent=1 // pred_region
      %38 = dma.done [#allocation8], 16
    $region17: #{tpu_custom_call.1} parent=1 // pred_fallthru
      _
    // Predicated region
    $region18: #{tpu_custom_call.1} parent=1 // pred_check
      _
    $region19: #{tpu_custom_call.1} parent=1 // pred_check_branch
      %40 = sbr.rel (0) target = $region21
    $region20: #{tpu_custom_call.1} parent=1 // pred_region
      %41 = dma.done [#allocation6], 256
    $region21: #{tpu_custom_call.1} parent=1 // pred_fallthru
      _
    %42 = sfence
    %v43 = vld [vmem:[#allocation9] sm:$0xff]
    %v44 = vld [vmem:[#allocation9 + $0x8] sm:$0xff]
    %v47 = vcombine.high %v43, %v43
    %v48 = vcombine.high %v44, %v44
    %vm51 = vcmask 1043456
    %v52 = vsel %vm51, %v43, -inf
    %v53 = vrot.slane %v52, 4
    %v54 = vmax.f32 %v52, %v53
    %v55 = vrot.slane %v54, 2
    %v56 = vmax.f32 %v54, %v55
    %v57 = vrot.slane %v56, 1
    %v58 = vmax.f32 %v56, %v57
    %v59 = vsel %vm51, %v47, -inf
    %v60 = vrot.slane %v59, 4
    %v61 = vmax.f32 %v59, %v60
    %v62 = vrot.slane %v61, 2
    %v63 = vmax.f32 %v61, %v62
    %v64 = vrot.slane %v63, 1
    %v65 = vmax.f32 %v63, %v64
    %v66 = vsel %vm51, %v44, -inf
    %v67 = vrot.slane %v66, 4
    %v68 = vmax.f32 %v66, %v67
    %v69 = vrot.slane %v68, 2
    %v70 = vmax.f32 %v68, %v69
    %v71 = vrot.slane %v70, 1
    %v72 = vmax.f32 %v70, %v71
    %v73 = vsel %vm51, %v48, -inf
    %v74 = vrot.slane %v73, 4
    %v75 = vmax.f32 %v73, %v74
    %v76 = vrot.slane %v75, 2
    %v77 = vmax.f32 %v75, %v76
    %v78 = vrot.slane %v77, 1
    %v79 = vmax.f32 %v77, %v78
    %v80 = vsel %vm51, %v43, 0.0
    %v81 = vrot.slane %v80, 4
    %v82 = vadd.f32 %v80, %v81
    %v83 = vrot.slane %v82, 2
    %v84 = vadd.f32 %v82, %v83
    %v85 = vrot.slane %v84, 1
    %v86 = vadd.f32 %v84, %v85
    %v87 = vsel %vm51, %v47, 0.0
    %v88 = vrot.slane %v87, 4
    %v89 = vadd.f32 %v87, %v88
    %v90 = vrot.slane %v89, 2
    %v91 = vadd.f32 %v89, %v90
    %v92 = vrot.slane %v91, 1
    %v93 = vadd.f32 %v91, %v92
    %v94 = vsel %vm51, %v44, 0.0
    %v95 = vrot.slane %v94, 4
    %v96 = vadd.f32 %v94, %v95
    %v97 = vrot.slane %v96, 2
    %v98 = vadd.f32 %v96, %v97
    %v99 = vrot.slane %v98, 1
    %v100 = vadd.f32 %v98, %v99
    %v101 = vsel %vm51, %v48, 0.0
    %v102 = vrot.slane %v101, 4
    %v103 = vadd.f32 %v101, %v102
    %v104 = vrot.slane %v103, 2
    %v105 = vadd.f32 %v103, %v104
    %v106 = vrot.slane %v105, 1
    %v107 = vadd.f32 %v105, %v106
    %p108 = scmp.eq.s32.totalorder 0, 0
    // Predicated region
    $region22: #{tpu_custom_call.1} parent=1 // pred_check
      %p109 = pneg %p108
    $region23: #{tpu_custom_call.1} parent=1 // pred_check_branch
      %111 = sbr.rel (%p109) target = $region25
    $region24: #{tpu_custom_call.1} parent=1 // pred_region
      %v116 = vcombine.low %v58, %v65
      %v118 = vunpack.c.l.s4 1983009808
      %v119 = vunpack.c.0.s8 %v118
      %v120 = vlaneseq
      %v121 = vshrl.u32 %v120, 7
      %v122 = vsub.s32 %v119, %v121
      %v123 = vrot.slane %v116, %v122
      %v124 = vcombine.low %v72, %v79
      %v126 = vunpack.c.l.s4 1983009808
      %v127 = vunpack.c.0.s8 %v126
      %v128 = vlaneseq
      %v129 = vshrl.u32 %v128, 7
      %v130 = vsub.s32 %v127, %v129
      %v131 = vrot.slane %v124, %v130
      %vm132 = vcmask 1044484
      %v133 = vsel %vm132, %v123, %v123
      %vm134 = vcmask 1046534
      %v135 = vsel %vm134, %v123, %v133
      %v136 = vrot.slane %v131, 7
      %vm137 = vcmask 1041409
      %v138 = vsel %vm137, %v136, %v135
      %vm139 = vcmask 1043459
      %v140 = vsel %vm139, %v136, %v138
      %vm141 = vcmask 1045509
      %v142 = vsel %vm141, %v136, %v140
      %vm143 = vcmask 1047559
      %v144 = vsel %vm143, %v136, %v142
      %146 = vst [vmem:[#allocation2] sm:$0xf] %v144
      %v151 = vcombine.low %v86, %v93
      %v153 = vunpack.c.l.s4 1983009808
      %v154 = vunpack.c.0.s8 %v153
      %v155 = vlaneseq
      %v156 = vshrl.u32 %v155, 7
      %v157 = vsub.s32 %v154, %v156
      %v158 = vrot.slane %v151, %v157
      %v159 = vcombine.low %v100, %v107
      %v161 = vunpack.c.l.s4 1983009808
      %v162 = vunpack.c.0.s8 %v161
      %v163 = vlaneseq
      %v164 = vshrl.u32 %v163, 7
      %v165 = vsub.s32 %v162, %v164
      %v166 = vrot.slane %v159, %v165
      %v167 = vsel %vm132, %v158, %v158
      %v168 = vsel %vm134, %v158, %v167
      %v169 = vrot.slane %v166, 7
      %v170 = vsel %vm137, %v169, %v168
      %v171 = vsel %vm139, %v169, %v170
      %v172 = vsel %vm141, %v169, %v171
      %v173 = vsel %vm143, %v169, %v172
      %175 = vst [vmem:[#allocation3] sm:$0xf] %v173
    $region25: #{tpu_custom_call.1} parent=1 // pred_fallthru
      _
    %p176 = scmp.ne.s32.totalorder 0, 0
    // Predicated region
    $region26: #{tpu_custom_call.1} parent=1 // pred_check
      %p177 = pneg %p176
    $region27: #{tpu_custom_call.1} parent=1 // pred_check_branch
      %179 = sbr.rel (%p177) target = $region29
    $region28: #{tpu_custom_call.1} parent=1 // pred_region
      %v180 = vld [vmem:[#allocation2] sm:$0xf]
      %v185 = vcombine.low %v58, %v65
      %v187 = vunpack.c.l.s4 1983009808
      %v188 = vunpack.c.0.s8 %v187
      %v189 = vlaneseq
      %v190 = vshrl.u32 %v189, 7
      %v191 = vsub.s32 %v188, %v190
      %v192 = vrot.slane %v185, %v191
      %v193 = vcombine.low %v72, %v79
      %v195 = vunpack.c.l.s4 1983009808
      %v196 = vunpack.c.0.s8 %v195
      %v197 = vlaneseq
      %v198 = vshrl.u32 %v197, 7
      %v199 = vsub.s32 %v196, %v198
      %v200 = vrot.slane %v193, %v199
      %vm201 = vcmask 1044484
      %v202 = vsel %vm201, %v192, %v192
      %vm203 = vcmask 1046534
      %v204 = vsel %vm203, %v192, %v202
      %v205 = vrot.slane %v200, 7
      %vm206 = vcmask 1041409
      %v207 = vsel %vm206, %v205, %v204
      %vm208 = vcmask 1043459
      %v209 = vsel %vm208, %v205, %v207
      %vm210 = vcmask 1045509
      %v211 = vsel %vm210, %v205, %v209
      %vm212 = vcmask 1047559
      %v213 = vsel %vm212, %v205, %v211
      %v215 = vmax.f32 %v180, %v213
      %216 = vst [vmem:[#allocation2] sm:$0xf] %v215
      %v217 = vld [vmem:[#allocation3] sm:$0xf]
      %v222 = vcombine.low %v86, %v93
      %v224 = vunpack.c.l.s4 1983009808
      %v225 = vunpack.c.0.s8 %v224
      %v226 = vlaneseq
      %v227 = vshrl.u32 %v226, 7
      %v228 = vsub.s32 %v225, %v227
      %v229 = vrot.slane %v222, %v228
      %v230 = vcombine.low %v100, %v107
      %v232 = vunpack.c.l.s4 1983009808
      %v233 = vunpack.c.0.s8 %v232
      %v234 = vlaneseq
      %v235 = vshrl.u32 %v234, 7
      %v236 = vsub.s32 %v233, %v235
      %v237 = vrot.slane %v230, %v236
      %v238 = vsel %vm201, %v229, %v229
      %v239 = vsel %vm203, %v229, %v238
      %v240 = vrot.slane %v237, 7
      %v241 = vsel %vm206, %v240, %v239
      %v242 = vsel %vm208, %v240, %v241
      %v243 = vsel %vm210, %v240, %v242
      %v244 = vsel %vm212, %v240, %v243
      %v246 = vadd.f32 %v217, %v244
      %247 = vst [vmem:[#allocation3] sm:$0xf] %v246
    $region29: #{tpu_custom_call.1} parent=1 // pred_fallthru
      _
    // Predicated region
    $region30: #{tpu_custom_call.1} parent=1 // pred_check
      %p248 = pneg %p108
    $region31: #{tpu_custom_call.1} parent=1 // pred_check_branch
      %250 = sbr.rel (%p248) target = $region33
    $region32: #{tpu_custom_call.1} parent=1 // pred_region
      %v251 = vld [vmem:[#allocation2] sm:$0xf]
      %v252 = vld [vmem:[#allocation3] sm:$0xf]
      %v253 = vmul.f32 %v252, 0.25
      %v254 = vlaneseq
      %v255 = vand.u32 %v254, 127
      %v256 = vadd.s32 %v255, 128
      %vm257 = vcmp.lt.s32.totalorder %v255, 0
      %v258 = vsub.s32 0, %v255
      %v259 = vsel %vm257, %v258, %v255
      %v260 = vshrl.u32 %v259, 4
      %v261 = vand.u32 %v259, 15
      %v262 = vsub.s32 0, %v261
      %v263 = vsel %vm257, %v262, %v261
      %vm264 = vcmp.lt.s32.totalorder %v256, 0
      %v265 = vsub.s32 0, %v256
      %v266 = vsel %vm264, %v265, %v256
      %v267 = vshrl.u32 %v266, 4
      %v268 = vand.u32 %v266, 15
      %v269 = vsub.s32 0, %v268
      %v270 = vsel %vm264, %v269, %v268
      %vm271 = vcmp.ne.s32.totalorder %v263, 0
      %vm272 = vcmp.ne.s32.totalorder %v270, 0
      %vm273 = vcmp.lt.s32.totalorder %v263, 0
      %vm274 = vcmp.lt.s32.totalorder %v270, 0
      %vm275 = vmand %vm273, %vm271
      %vm276 = vmand %vm274, %vm272
      %v277 = vadd.s32 %v263, 16
      %v278 = vadd.s32 %v270, 16
      %v279 = vsel %vm275, %v277, %v263
      %v280 = vsel %vm276, %v278, %v270
      %s281 = sld [smem:[#allocation4]]
      %v282 = vstv %s281
      %v285 = vunpack.c.l.s4 1983009808
      %v286 = vunpack.c.0.s8 %v285
      %v287 = vlaneseq
      %v288 = vshrl.u32 %v287, 7
      %v289 = vsub.s32 %v286, %v288
      %v290 = vrot.slane %v251, %v289
      %v291 = vcombine.high %v290, %v290
      %294 = vrot.lane.b32.xlu0 %v290, 48
      %v295 = vpop.permute.xlu0 %294
      %296 = vrot.lane.b32.xlu0 %v291, 48
      %v297 = vpop.permute.xlu0 %296
      %vm298 = vcmp.lt.s32.totalorder %v255, 48
      %v299 = vsel %vm298, %v295, %v297
      %v300 = vsel %vm298, %v297, %v295
      %vm301 = vcmp.ge.s32.totalorder %v255, 48
      %vm302 = vcmp.ge.s32.totalorder %v256, 48
      %v303 = vsel %vm301, %v300, 0.0
      %v304 = vsel %vm302, %v299, 0.0
      %305 = vrot.lane.b32.xlu0 %v290, 32
      %v306 = vpop.permute.xlu0 %305
      %307 = vrot.lane.b32.xlu0 %v291, 32
      %v308 = vpop.permute.xlu0 %307
      %vm309 = vcmp.lt.s32.totalorder %v255, 32
      %v310 = vsel %vm309, %v306, %v308
      %v311 = vsel %vm309, %v308, %v306
      %vm312 = vcmp.ge.s32.totalorder %v255, 32
      %vm313 = vcmp.ge.s32.totalorder %v256, 32
      %v314 = vsel %vm312, %v311, 0.0
      %v315 = vsel %vm313, %v310, 0.0
      %316 = vrot.lane.b32.xlu0 %v290, 16
      %v317 = vpop.permute.xlu0 %316
      %318 = vrot.lane.b32.xlu0 %v291, 16
      %v319 = vpop.permute.xlu0 %318
      %vm320 = vcmp.lt.s32.totalorder %v255, 16
      %v321 = vsel %vm320, %v317, %v319
      %v322 = vsel %vm320, %v319, %v317
      %vm323 = vcmp.ge.s32.totalorder %v255, 16
      %vm324 = vcmp.ge.s32.totalorder %v256, 16
      %v325 = vsel %vm323, %v322, 0.0
      %v326 = vsel %vm324, %v321, 0.0
      %327 = vrot.lane.b32.xlu0 %v290, 112
      %v328 = vpop.permute.xlu0 %327
      %329 = vrot.lane.b32.xlu0 %v291, 112
      %v330 = vpop.permute.xlu0 %329
      %vm331 = vcmp.lt.s32.totalorder %v255, 112
      %v332 = vsel %vm331, %v328, %v330
      %v333 = vsel %vm331, %v330, %v328
      %vm334 = vcmp.lt.s32.totalorder %v255, 240
      %vm335 = vcmp.lt.s32.totalorder %v256, 240
      %v336 = vsel %vm334, %v332, 0.0
      %v337 = vsel %vm335, %v333, 0.0
      %338 = vrot.lane.b32.xlu0 %v290, 96
      %v339 = vpop.permute.xlu0 %338
      %340 = vrot.lane.b32.xlu0 %v291, 96
      %v341 = vpop.permute.xlu0 %340
      %vm342 = vcmp.lt.s32.totalorder %v255, 96
      %v343 = vsel %vm342, %v339, %v341
      %v344 = vsel %vm342, %v341, %v339
      %vm345 = vcmp.lt.s32.totalorder %v255, 224
      %vm346 = vcmp.lt.s32.totalorder %v256, 224
      %v347 = vsel %vm345, %v343, 0.0
      %v348 = vsel %vm346, %v344, 0.0
      %349 = vrot.lane.b32.xlu0 %v290, 80
      %v350 = vpop.permute.xlu0 %349
      %351 = vrot.lane.b32.xlu0 %v291, 80
      %v352 = vpop.permute.xlu0 %351
      %vm353 = vcmp.lt.s32.totalorder %v255, 80
      %v354 = vsel %vm353, %v350, %v352
      %v355 = vsel %vm353, %v352, %v350
      %vm356 = vcmp.lt.s32.totalorder %v255, 208
      %vm357 = vcmp.lt.s32.totalorder %v256, 208
      %v358 = vsel %vm356, %v354, 0.0
      %v359 = vsel %vm357, %v355, 0.0
      %s360 = sld [smem:[#allocation5]]
      %v361 = vstv %s360
      %v362 = vmul.f32 %v303, %v361
      %v363 = vmul.f32 %v304, %v361
      %s364 = sld [smem:[#allocation5 + $0x7]]
      %v365 = vstv %s364
      %v366 = vmul.f32 %v314, %v365
      %v367 = vmul.f32 %v315, %v365
      %v368 = vadd.f32 %v362, %v366
      %v369 = vadd.f32 %v363, %v367
      %s370 = sld [smem:[#allocation5 + $0xe]]
      %v371 = vstv %s370
      %v372 = vmul.f32 %v325, %v371
      %v373 = vmul.f32 %v326, %v371
      %v374 = vadd.f32 %v368, %v372
      %v375 = vadd.f32 %v369, %v373
      %s376 = sld [smem:[#allocation5 + $0x15]]
      %v377 = vstv %s376
      %v378 = vmul.f32 %v251, %v377
      %v381 = vunpack.c.l.s4 1983009808
      %v382 = vunpack.c.0.s8 %v381
      %v383 = vlaneseq
      %v384 = vshrl.u32 %v383, 7
      %v385 = vsub.s32 %v382, %v384
      %v386 = vrot.slane %v378, %v385
      %v387 = vcombine.high %v386, %v386
      %v390 = vadd.f32 %v374, %v386
      %v391 = vadd.f32 %v375, %v387
      %s392 = sld [smem:[#allocation5 + $0x1c]]
      %v393 = vstv %s392
      %v394 = vmul.f32 %v336, %v393
      %v395 = vmul.f32 %v337, %v393
      %v396 = vadd.f32 %v390, %v394
      %v397 = vadd.f32 %v391, %v395
      %s398 = sld [smem:[#allocation5 + $0x23]]
      %v399 = vstv %s398
      %v400 = vmul.f32 %v347, %v399
      %v401 = vmul.f32 %v348, %v399
      %v402 = vadd.f32 %v396, %v400
      %v403 = vadd.f32 %v397, %v401
      %s404 = sld [smem:[#allocation5 + $0x2a]]
      %v405 = vstv %s404
      %v406 = vmul.f32 %v358, %v405
      %v407 = vmul.f32 %v359, %v405
      %v408 = vadd.f32 %v402, %v406
      %v409 = vadd.f32 %v403, %v407
      %410 = vrot.lane.b32.xlu0 %v408, 3
      %v411 = vpop.permute.xlu0 %410
      %412 = vrot.lane.b32.xlu0 %v409, 3
      %v413 = vpop.permute.xlu0 %412
      %vm414 = vcmp.lt.s32.totalorder %v255, 3
      %v415 = vsel %vm414, %v411, %v413
      %v416 = vsel %vm414, %v413, %v411
      %vm417 = vcmp.ge.s32.totalorder %v279, 3
      %vm418 = vcmp.ge.s32.totalorder %v280, 3
      %v419 = vsel %vm417, %v416, 0.0
      %v420 = vsel %vm418, %v415, 0.0
      %v421 = vadd.f32 %v282, %v419
      %v422 = vadd.f32 %v282, %v420
      %s423 = sld [smem:[#allocation5 + $0x1]]
      %v424 = vstv %s423
      %v425 = vmul.f32 %v303, %v424
      %v426 = vmul.f32 %v304, %v424
      %s427 = sld [smem:[#allocation5 + $0x8]]
      %v428 = vstv %s427
      %v429 = vmul.f32 %v314, %v428
      %v430 = vmul.f32 %v315, %v428
      %v431 = vadd.f32 %v425, %v429
      %v432 = vadd.f32 %v426, %v430
      %s433 = sld [smem:[#allocation5 + $0xf]]
      %v434 = vstv %s433
      %v435 = vmul.f32 %v325, %v434
      %v436 = vmul.f32 %v326, %v434
      %v437 = vadd.f32 %v431, %v435
      %v438 = vadd.f32 %v432, %v436
      %s439 = sld [smem:[#allocation5 + $0x16]]
      %v440 = vstv %s439
      %v441 = vmul.f32 %v251, %v440
      %v444 = vunpack.c.l.s4 1983009808
      %v445 = vunpack.c.0.s8 %v444
      %v446 = vlaneseq
      %v447 = vshrl.u32 %v446, 7
      %v448 = vsub.s32 %v445, %v447
      %v449 = vrot.slane %v441, %v448
      %v450 = vcombine.high %v449, %v449
      %v453 = vadd.f32 %v437, %v449
      %v454 = vadd.f32 %v438, %v450
      %s455 = sld [smem:[#allocation5 + $0x1d]]
      %v456 = vstv %s455
      %v457 = vmul.f32 %v336, %v456
      %v458 = vmul.f32 %v337, %v456
      %v459 = vadd.f32 %v453, %v457
      %v460 = vadd.f32 %v454, %v458
      %s461 = sld [smem:[#allocation5 + $0x24]]
      %v462 = vstv %s461
      %v463 = vmul.f32 %v347, %v462
      %v464 = vmul.f32 %v348, %v462
      %v465 = vadd.f32 %v459, %v463
      %v466 = vadd.f32 %v460, %v464
      %s467 = sld [smem:[#allocation5 + $0x2b]]
      %v468 = vstv %s467
      %v469 = vmul.f32 %v358, %v468
      %v470 = vmul.f32 %v359, %v468
      %v471 = vadd.f32 %v465, %v469
      %v472 = vadd.f32 %v466, %v470
      %473 = vrot.lane.b32.xlu0 %v471, 2
      %v474 = vpop.permute.xlu0 %473
      %475 = vrot.lane.b32.xlu0 %v472, 2
      %v476 = vpop.permute.xlu0 %475
      %vm477 = vcmp.lt.s32.totalorder %v255, 2
      %v478 = vsel %vm477, %v474, %v476
      %v479 = vsel %vm477, %v476, %v474
      %vm480 = vcmp.ge.s32.totalorder %v279, 2
      %vm481 = vcmp.ge.s32.totalorder %v280, 2
      %v482 = vsel %vm480, %v479, 0.0
      %v483 = vsel %vm481, %v478, 0.0
      %v484 = vadd.f32 %v421, %v482
      %v485 = vadd.f32 %v422, %v483
      %s486 = sld [smem:[#allocation5 + $0x2]]
      %v487 = vstv %s486
      %v488 = vmul.f32 %v303, %v487
      %v489 = vmul.f32 %v304, %v487
      %s490 = sld [smem:[#allocation5 + $0x9]]
      %v491 = vstv %s490
      %v492 = vmul.f32 %v314, %v491
      %v493 = vmul.f32 %v315, %v491
      %v494 = vadd.f32 %v488, %v492
      %v495 = vadd.f32 %v489, %v493
      %s496 = sld [smem:[#allocation5 + $0x10]]
      %v497 = vstv %s496
      %v498 = vmul.f32 %v325, %v497
      %v499 = vmul.f32 %v326, %v497
      %v500 = vadd.f32 %v494, %v498
      %v501 = vadd.f32 %v495, %v499
      %s502 = sld [smem:[#allocation5 + $0x17]]
      %v503 = vstv %s502
      %v504 = vmul.f32 %v251, %v503
      %v507 = vunpack.c.l.s4 1983009808
      %v508 = vunpack.c.0.s8 %v507
      %v509 = vlaneseq
      %v510 = vshrl.u32 %v509, 7
      %v511 = vsub.s32 %v508, %v510
      %v512 = vrot.slane %v504, %v511
      %v513 = vcombine.high %v512, %v512
      %v516 = vadd.f32 %v500, %v512
      %v517 = vadd.f32 %v501, %v513
      %s518 = sld [smem:[#allocation5 + $0x1e]]
      %v519 = vstv %s518
      %v520 = vmul.f32 %v336, %v519
      %v521 = vmul.f32 %v337, %v519
      %v522 = vadd.f32 %v516, %v520
      %v523 = vadd.f32 %v517, %v521
      %s524 = sld [smem:[#allocation5 + $0x25]]
      %v525 = vstv %s524
      %v526 = vmul.f32 %v347, %v525
      %v527 = vmul.f32 %v348, %v525
      %v528 = vadd.f32 %v522, %v526
      %v529 = vadd.f32 %v523, %v527
      %s530 = sld [smem:[#allocation5 + $0x2c]]
      %v531 = vstv %s530
      %v532 = vmul.f32 %v358, %v531
      %v533 = vmul.f32 %v359, %v531
      %v534 = vadd.f32 %v528, %v532
      %v535 = vadd.f32 %v529, %v533
      %536 = vrot.lane.b32.xlu0 %v534, 1
      %v537 = vpop.permute.xlu0 %536
      %538 = vrot.lane.b32.xlu0 %v535, 1
      %v539 = vpop.permute.xlu0 %538
      %vm540 = vcmp.lt.s32.totalorder %v255, 1
      %v541 = vsel %vm540, %v537, %v539
      %v542 = vsel %vm540, %v539, %v537
      %vm543 = vcmp.ge.s32.totalorder %v279, 1
      %vm544 = vcmp.ge.s32.totalorder %v280, 1
      %v545 = vsel %vm543, %v542, 0.0
      %v546 = vsel %vm544, %v541, 0.0
      %v547 = vadd.f32 %v484, %v545
      %v548 = vadd.f32 %v485, %v546
      %s549 = sld [smem:[#allocation5 + $0x3]]
      %v550 = vstv %s549
      %v551 = vmul.f32 %v303, %v550
      %v552 = vmul.f32 %v304, %v550
      %s553 = sld [smem:[#allocation5 + $0xa]]
      %v554 = vstv %s553
      %v555 = vmul.f32 %v314, %v554
      %v556 = vmul.f32 %v315, %v554
      %v557 = vadd.f32 %v551, %v555
      %v558 = vadd.f32 %v552, %v556
      %s559 = sld [smem:[#allocation5 + $0x11]]
      %v560 = vstv %s559
      %v561 = vmul.f32 %v325, %v560
      %v562 = vmul.f32 %v326, %v560
      %v563 = vadd.f32 %v557, %v561
      %v564 = vadd.f32 %v558, %v562
      %s565 = sld [smem:[#allocation5 + $0x18]]
      %v566 = vstv %s565
      %v567 = vmul.f32 %v251, %v566
      %v570 = vunpack.c.l.s4 1983009808
      %v571 = vunpack.c.0.s8 %v570
      %v572 = vlaneseq
      %v573 = vshrl.u32 %v572, 7
      %v574 = vsub.s32 %v571, %v573
      %v575 = vrot.slane %v567, %v574
      %v576 = vcombine.high %v575, %v575
      %v579 = vadd.f32 %v563, %v575
      %v580 = vadd.f32 %v564, %v576
      %s581 = sld [smem:[#allocation5 + $0x1f]]
      %v582 = vstv %s581
      %v583 = vmul.f32 %v336, %v582
      %v584 = vmul.f32 %v337, %v582
      %v585 = vadd.f32 %v579, %v583
      %v586 = vadd.f32 %v580, %v584
      %s587 = sld [smem:[#allocation5 + $0x26]]
      %v588 = vstv %s587
      %v589 = vmul.f32 %v347, %v588
      %v590 = vmul.f32 %v348, %v588
      %v591 = vadd.f32 %v585, %v589
      %v592 = vadd.f32 %v586, %v590
      %s593 = sld [smem:[#allocation5 + $0x2d]]
      %v594 = vstv %s593
      %v595 = vmul.f32 %v358, %v594
      %v596 = vmul.f32 %v359, %v594
      %v597 = vadd.f32 %v591, %v595
      %v598 = vadd.f32 %v592, %v596
      %v599 = vadd.f32 %v547, %v597
      %v600 = vadd.f32 %v548, %v598
      %s601 = sld [smem:[#allocation5 + $0x4]]
      %v602 = vstv %s601
      %v603 = vmul.f32 %v303, %v602
      %v604 = vmul.f32 %v304, %v602
      %s605 = sld [smem:[#allocation5 + $0xb]]
      %v606 = vstv %s605
      %v607 = vmul.f32 %v314, %v606
      %v608 = vmul.f32 %v315, %v606
      %v609 = vadd.f32 %v603, %v607
      %v610 = vadd.f32 %v604, %v608
      %s611 = sld [smem:[#allocation5 + $0x12]]
      %v612 = vstv %s611
      %v613 = vmul.f32 %v325, %v612
      %v614 = vmul.f32 %v326, %v612
      %v615 = vadd.f32 %v609, %v613
      %v616 = vadd.f32 %v610, %v614
      %s617 = sld [smem:[#allocation5 + $0x19]]
      %v618 = vstv %s617
      %v619 = vmul.f32 %v251, %v618
      %v622 = vunpack.c.l.s4 1983009808
      %v623 = vunpack.c.0.s8 %v622
      %v624 = vlaneseq
      %v625 = vshrl.u32 %v624, 7
      %v626 = vsub.s32 %v623, %v625
      %v627 = vrot.slane %v619, %v626
      %v628 = vcombine.high %v627, %v627
      %v631 = vadd.f32 %v615, %v627
      %v632 = vadd.f32 %v616, %v628
      %s633 = sld [smem:[#allocation5 + $0x20]]
      %v634 = vstv %s633
      %v635 = vmul.f32 %v336, %v634
      %v636 = vmul.f32 %v337, %v634
      %v637 = vadd.f32 %v631, %v635
      %v638 = vadd.f32 %v632, %v636
      %s639 = sld [smem:[#allocation5 + $0x27]]
      %v640 = vstv %s639
      %v641 = vmul.f32 %v347, %v640
      %v642 = vmul.f32 %v348, %v640
      %v643 = vadd.f32 %v637, %v641
      %v644 = vadd.f32 %v638, %v642
      %s645 = sld [smem:[#allocation5 + $0x2e]]
      %v646 = vstv %s645
      %v647 = vmul.f32 %v358, %v646
      %v648 = vmul.f32 %v359, %v646
      %v649 = vadd.f32 %v643, %v647
      %v650 = vadd.f32 %v644, %v648
      %651 = vrot.lane.b32.xlu0 %v649, 127
      %v652 = vpop.permute.xlu0 %651
      %653 = vrot.lane.b32.xlu0 %v650, 127
      %v654 = vpop.permute.xlu0 %653
      %vm655 = vcmp.lt.s32.totalorder %v255, 127
      %v656 = vsel %vm655, %v652, %v654
      %v657 = vsel %vm655, %v654, %v652
      %vm658 = vcmp.lt.s32.totalorder %v279, 15
      %vm659 = vcmp.lt.s32.totalorder %v280, 15
      %v660 = vsel %vm658, %v656, 0.0
      %v661 = vsel %vm659, %v657, 0.0
      %v662 = vadd.f32 %v599, %v660
      %v663 = vadd.f32 %v600, %v661
      %s664 = sld [smem:[#allocation5 + $0x5]]
      %v665 = vstv %s664
      %v666 = vmul.f32 %v303, %v665
      %v667 = vmul.f32 %v304, %v665
      %s668 = sld [smem:[#allocation5 + $0xc]]
      %v669 = vstv %s668
      %v670 = vmul.f32 %v314, %v669
      %v671 = vmul.f32 %v315, %v669
      %v672 = vadd.f32 %v666, %v670
      %v673 = vadd.f32 %v667, %v671
      %s674 = sld [smem:[#allocation5 + $0x13]]
      %v675 = vstv %s674
      %v676 = vmul.f32 %v325, %v675
      %v677 = vmul.f32 %v326, %v675
      %v678 = vadd.f32 %v672, %v676
      %v679 = vadd.f32 %v673, %v677
      %s680 = sld [smem:[#allocation5 + $0x1a]]
      %v681 = vstv %s680
      %v682 = vmul.f32 %v251, %v681
      %v685 = vunpack.c.l.s4 1983009808
      %v686 = vunpack.c.0.s8 %v685
      %v687 = vlaneseq
      %v688 = vshrl.u32 %v687, 7
      %v689 = vsub.s32 %v686, %v688
      %v690 = vrot.slane %v682, %v689
      %v691 = vcombine.high %v690, %v690
      %v694 = vadd.f32 %v678, %v690
      %v695 = vadd.f32 %v679, %v691
      %s696 = sld [smem:[#allocation5 + $0x21]]
      %v697 = vstv %s696
      %v698 = vmul.f32 %v336, %v697
      %v699 = vmul.f32 %v337, %v697
      %v700 = vadd.f32 %v694, %v698
      %v701 = vadd.f32 %v695, %v699
      %s702 = sld [smem:[#allocation5 + $0x28]]
      %v703 = vstv %s702
      %v704 = vmul.f32 %v347, %v703
      %v705 = vmul.f32 %v348, %v703
      %v706 = vadd.f32 %v700, %v704
      %v707 = vadd.f32 %v701, %v705
      %s708 = sld [smem:[#allocation5 + $0x2f]]
      %v709 = vstv %s708
      %v710 = vmul.f32 %v358, %v709
      %v711 = vmul.f32 %v359, %v709
      %v712 = vadd.f32 %v706, %v710
      %v713 = vadd.f32 %v707, %v711
      %714 = vrot.lane.b32.xlu0 %v712, 126
      %v715 = vpop.permute.xlu0 %714
      %716 = vrot.lane.b32.xlu0 %v713, 126
      %v717 = vpop.permute.xlu0 %716
      %vm718 = vcmp.lt.s32.totalorder %v255, 126
      %v719 = vsel %vm718, %v715, %v717
      %v720 = vsel %vm718, %v717, %v715
      %vm721 = vcmp.lt.s32.totalorder %v279, 14
      %vm722 = vcmp.lt.s32.totalorder %v280, 14
      %v723 = vsel %vm721, %v719, 0.0
      %v724 = vsel %vm722, %v720, 0.0
      %v725 = vadd.f32 %v662, %v723
      %v726 = vadd.f32 %v663, %v724
      %s727 = sld [smem:[#allocation5 + $0x6]]
      %v728 = vstv %s727
      %v729 = vmul.f32 %v303, %v728
      %v730 = vmul.f32 %v304, %v728
      %s731 = sld [smem:[#allocation5 + $0xd]]
      %v732 = vstv %s731
      %v733 = vmul.f32 %v314, %v732
      %v734 = vmul.f32 %v315, %v732
      %v735 = vadd.f32 %v729, %v733
      %v736 = vadd.f32 %v730, %v734
      %s737 = sld [smem:[#allocation5 + $0x14]]
      %v738 = vstv %s737
      %v739 = vmul.f32 %v325, %v738
      %v740 = vmul.f32 %v326, %v738
      %v741 = vadd.f32 %v735, %v739
      %v742 = vadd.f32 %v736, %v740
      %s743 = sld [smem:[#allocation5 + $0x1b]]
      %v744 = vstv %s743
      %v745 = vmul.f32 %v251, %v744
      %v748 = vunpack.c.l.s4 1983009808
      %v749 = vunpack.c.0.s8 %v748
      %v750 = vlaneseq
      %v751 = vshrl.u32 %v750, 7
      %v752 = vsub.s32 %v749, %v751
      %v753 = vrot.slane %v745, %v752
      %v754 = vcombine.high %v753, %v753
      %v757 = vadd.f32 %v741, %v753
      %v758 = vadd.f32 %v742, %v754
      %s759 = sld [smem:[#allocation5 + $0x22]]
      %v760 = vstv %s759
      %v761 = vmul.f32 %v336, %v760
      %v762 = vmul.f32 %v337, %v760
      %v763 = vadd.f32 %v757, %v761
      %v764 = vadd.f32 %v758, %v762
      %s765 = sld [smem:[#allocation5 + $0x29]]
      %v766 = vstv %s765
      %v767 = vmul.f32 %v347, %v766
      %v768 = vmul.f32 %v348, %v766
      %v769 = vadd.f32 %v763, %v767
      %v770 = vadd.f32 %v764, %v768
      %s771 = sld [smem:[#allocation5 + $0x30]]
      %v772 = vstv %s771
      %v773 = vmul.f32 %v358, %v772
      %v774 = vmul.f32 %v359, %v772
      %v775 = vadd.f32 %v769, %v773
      %v776 = vadd.f32 %v770, %v774
      %777 = vrot.lane.b32.xlu0 %v775, 125
      %v778 = vpop.permute.xlu0 %777
      %779 = vrot.lane.b32.xlu0 %v776, 125
      %v780 = vpop.permute.xlu0 %779
      %vm781 = vcmp.lt.s32.totalorder %v255, 125
      %v782 = vsel %vm781, %v778, %v780
      %v783 = vsel %vm781, %v780, %v778
      %vm784 = vcmp.lt.s32.totalorder %v279, 13
      %vm785 = vcmp.lt.s32.totalorder %v280, 13
      %v786 = vsel %vm784, %v782, 0.0
      %v787 = vsel %vm785, %v783, 0.0
      %v788 = vadd.f32 %v725, %v786
      %v789 = vadd.f32 %v726, %v787
      %v792 = vunpack.c.l.s4 1983009808
      %v793 = vunpack.c.0.s8 %v792
      %v794 = vlaneseq
      %v795 = vshrl.u32 %v794, 7
      %v796 = vsub.s32 %v793, %v795
      %v797 = vrot.slane %v253, %v796
      %v798 = vcombine.high %v797, %v797
      %801 = vrot.lane.b32.xlu0 %v797, 48
      %v802 = vpop.permute.xlu0 %801
      %803 = vrot.lane.b32.xlu0 %v798, 48
      %v804 = vpop.permute.xlu0 %803
      %v805 = vsel %vm298, %v802, %v804
      %v806 = vsel %vm298, %v804, %v802
      %v807 = vsel %vm301, %v806, 0.0
      %v808 = vsel %vm302, %v805, 0.0
      %809 = vrot.lane.b32.xlu0 %v797, 32
      %v810 = vpop.permute.xlu0 %809
      %811 = vrot.lane.b32.xlu0 %v798, 32
      %v812 = vpop.permute.xlu0 %811
      %v813 = vsel %vm309, %v810, %v812
      %v814 = vsel %vm309, %v812, %v810
      %v815 = vsel %vm312, %v814, 0.0
      %v816 = vsel %vm313, %v813, 0.0
      %817 = vrot.lane.b32.xlu0 %v797, 16
      %v818 = vpop.permute.xlu0 %817
      %819 = vrot.lane.b32.xlu0 %v798, 16
      %v820 = vpop.permute.xlu0 %819
      %v821 = vsel %vm320, %v818, %v820
      %v822 = vsel %vm320, %v820, %v818
      %v823 = vsel %vm323, %v822, 0.0
      %v824 = vsel %vm324, %v821, 0.0
      %825 = vrot.lane.b32.xlu0 %v797, 112
      %v826 = vpop.permute.xlu0 %825
      %827 = vrot.lane.b32.xlu0 %v798, 112
      %v828 = vpop.permute.xlu0 %827
      %v829 = vsel %vm331, %v826, %v828
      %v830 = vsel %vm331, %v828, %v826
      %v831 = vsel %vm334, %v829, 0.0
      %v832 = vsel %vm335, %v830, 0.0
      %833 = vrot.lane.b32.xlu0 %v797, 96
      %v834 = vpop.permute.xlu0 %833
      %835 = vrot.lane.b32.xlu0 %v798, 96
      %v836 = vpop.permute.xlu0 %835
      %v837 = vsel %vm342, %v834, %v836
      %v838 = vsel %vm342, %v836, %v834
      %v839 = vsel %vm345, %v837, 0.0
      %v840 = vsel %vm346, %v838, 0.0
      %841 = vrot.lane.b32.xlu0 %v797, 80
      %v842 = vpop.permute.xlu0 %841
      %843 = vrot.lane.b32.xlu0 %v798, 80
      %v844 = vpop.permute.xlu0 %843
      %v845 = vsel %vm353, %v842, %v844
      %v846 = vsel %vm353, %v844, %v842
      %v847 = vsel %vm356, %v845, 0.0
      %v848 = vsel %vm357, %v846, 0.0
      %s849 = sld [smem:[#allocation5 + $0x31]]
      %v850 = vstv %s849
      %v851 = vmul.f32 %v807, %v850
      %v852 = vmul.f32 %v808, %v850
      %s853 = sld [smem:[#allocation5 + $0x38]]
      %v854 = vstv %s853
      %v855 = vmul.f32 %v815, %v854
      %v856 = vmul.f32 %v816, %v854
      %v857 = vadd.f32 %v851, %v855
      %v858 = vadd.f32 %v852, %v856
      %s859 = sld [smem:[#allocation5 + $0x3f]]
      %v860 = vstv %s859
      %v861 = vmul.f32 %v823, %v860
      %v862 = vmul.f32 %v824, %v860
      %v863 = vadd.f32 %v857, %v861
      %v864 = vadd.f32 %v858, %v862
      %s865 = sld [smem:[#allocation5 + $0x46]]
      %v866 = vstv %s865
      %v867 = vmul.f32 %v253, %v866
      %v870 = vunpack.c.l.s4 1983009808
      %v871 = vunpack.c.0.s8 %v870
      %v872 = vlaneseq
      %v873 = vshrl.u32 %v872, 7
      %v874 = vsub.s32 %v871, %v873
      %v875 = vrot.slane %v867, %v874
      %v876 = vcombine.high %v875, %v875
      %v879 = vadd.f32 %v863, %v875
      %v880 = vadd.f32 %v864, %v876
      %s881 = sld [smem:[#allocation5 + $0x4d]]
      %v882 = vstv %s881
      %v883 = vmul.f32 %v831, %v882
      %v884 = vmul.f32 %v832, %v882
      %v885 = vadd.f32 %v879, %v883
      %v886 = vadd.f32 %v880, %v884
      %s887 = sld [smem:[#allocation5 + $0x54]]
      %v888 = vstv %s887
      %v889 = vmul.f32 %v839, %v888
      %v890 = vmul.f32 %v840, %v888
      %v891 = vadd.f32 %v885, %v889
      %v892 = vadd.f32 %v886, %v890
      %s893 = sld [smem:[#allocation5 + $0x5b]]
      %v894 = vstv %s893
      %v895 = vmul.f32 %v847, %v894
      %v896 = vmul.f32 %v848, %v894
      %v897 = vadd.f32 %v891, %v895
      %v898 = vadd.f32 %v892, %v896
      %899 = vrot.lane.b32.xlu0 %v897, 3
      %v900 = vpop.permute.xlu0 %899
      %901 = vrot.lane.b32.xlu0 %v898, 3
      %v902 = vpop.permute.xlu0 %901
      %v903 = vsel %vm414, %v900, %v902
      %v904 = vsel %vm414, %v902, %v900
      %v905 = vsel %vm417, %v904, 0.0
      %v906 = vsel %vm418, %v903, 0.0
      %v907 = vadd.f32 %v788, %v905
      %v908 = vadd.f32 %v789, %v906
      %s909 = sld [smem:[#allocation5 + $0x32]]
      %v910 = vstv %s909
      %v911 = vmul.f32 %v807, %v910
      %v912 = vmul.f32 %v808, %v910
      %s913 = sld [smem:[#allocation5 + $0x39]]
      %v914 = vstv %s913
      %v915 = vmul.f32 %v815, %v914
      %v916 = vmul.f32 %v816, %v914
      %v917 = vadd.f32 %v911, %v915
      %v918 = vadd.f32 %v912, %v916
      %s919 = sld [smem:[#allocation5 + $0x40]]
      %v920 = vstv %s919
      %v921 = vmul.f32 %v823, %v920
      %v922 = vmul.f32 %v824, %v920
      %v923 = vadd.f32 %v917, %v921
      %v924 = vadd.f32 %v918, %v922
      %s925 = sld [smem:[#allocation5 + $0x47]]
      %v926 = vstv %s925
      %v927 = vmul.f32 %v253, %v926
      %v930 = vunpack.c.l.s4 1983009808
      %v931 = vunpack.c.0.s8 %v930
      %v932 = vlaneseq
      %v933 = vshrl.u32 %v932, 7
      %v934 = vsub.s32 %v931, %v933
      %v935 = vrot.slane %v927, %v934
      %v936 = vcombine.high %v935, %v935
      %v939 = vadd.f32 %v923, %v935
      %v940 = vadd.f32 %v924, %v936
      %s941 = sld [smem:[#allocation5 + $0x4e]]
      %v942 = vstv %s941
      %v943 = vmul.f32 %v831, %v942
      %v944 = vmul.f32 %v832, %v942
      %v945 = vadd.f32 %v939, %v943
      %v946 = vadd.f32 %v940, %v944
      %s947 = sld [smem:[#allocation5 + $0x55]]
      %v948 = vstv %s947
      %v949 = vmul.f32 %v839, %v948
      %v950 = vmul.f32 %v840, %v948
      %v951 = vadd.f32 %v945, %v949
      %v952 = vadd.f32 %v946, %v950
      %s953 = sld [smem:[#allocation5 + $0x5c]]
      %v954 = vstv %s953
      %v955 = vmul.f32 %v847, %v954
      %v956 = vmul.f32 %v848, %v954
      %v957 = vadd.f32 %v951, %v955
      %v958 = vadd.f32 %v952, %v956
      %959 = vrot.lane.b32.xlu0 %v957, 2
      %v960 = vpop.permute.xlu0 %959
      %961 = vrot.lane.b32.xlu0 %v958, 2
      %v962 = vpop.permute.xlu0 %961
      %v963 = vsel %vm477, %v960, %v962
      %v964 = vsel %vm477, %v962, %v960
      %v965 = vsel %vm480, %v964, 0.0
      %v966 = vsel %vm481, %v963, 0.0
      %v967 = vadd.f32 %v907, %v965
      %v968 = vadd.f32 %v908, %v966
      %s969 = sld [smem:[#allocation5 + $0x33]]
      %v970 = vstv %s969
      %v971 = vmul.f32 %v807, %v970
      %v972 = vmul.f32 %v808, %v970
      %s973 = sld [smem:[#allocation5 + $0x3a]]
      %v974 = vstv %s973
      %v975 = vmul.f32 %v815, %v974
      %v976 = vmul.f32 %v816, %v974
      %v977 = vadd.f32 %v971, %v975
      %v978 = vadd.f32 %v972, %v976
      %s979 = sld [smem:[#allocation5 + $0x41]]
      %v980 = vstv %s979
      %v981 = vmul.f32 %v823, %v980
      %v982 = vmul.f32 %v824, %v980
      %v983 = vadd.f32 %v977, %v981
      %v984 = vadd.f32 %v978, %v982
      %s985 = sld [smem:[#allocation5 + $0x48]]
      %v986 = vstv %s985
      %v987 = vmul.f32 %v253, %v986
      %v990 = vunpack.c.l.s4 1983009808
      %v991 = vunpack.c.0.s8 %v990
      %v992 = vlaneseq
      %v993 = vshrl.u32 %v992, 7
      %v994 = vsub.s32 %v991, %v993
      %v995 = vrot.slane %v987, %v994
      %v996 = vcombine.high %v995, %v995
      %v999 = vadd.f32 %v983, %v995
      %v1000 = vadd.f32 %v984, %v996
      %s1001 = sld [smem:[#allocation5 + $0x4f]]
      %v1002 = vstv %s1001
      %v1003 = vmul.f32 %v831, %v1002
      %v1004 = vmul.f32 %v832, %v1002
      %v1005 = vadd.f32 %v999, %v1003
      %v1006 = vadd.f32 %v1000, %v1004
      %s1007 = sld [smem:[#allocation5 + $0x56]]
      %v1008 = vstv %s1007
      %v1009 = vmul.f32 %v839, %v1008
      %v1010 = vmul.f32 %v840, %v1008
      %v1011 = vadd.f32 %v1005, %v1009
      %v1012 = vadd.f32 %v1006, %v1010
      %s1013 = sld [smem:[#allocation5 + $0x5d]]
      %v1014 = vstv %s1013
      %v1015 = vmul.f32 %v847, %v1014
      %v1016 = vmul.f32 %v848, %v1014
      %v1017 = vadd.f32 %v1011, %v1015
      %v1018 = vadd.f32 %v1012, %v1016
      %1019 = vrot.lane.b32.xlu0 %v1017, 1
      %v1020 = vpop.permute.xlu0 %1019
      %1021 = vrot.lane.b32.xlu0 %v1018, 1
      %v1022 = vpop.permute.xlu0 %1021
      %v1023 = vsel %vm540, %v1020, %v1022
      %v1024 = vsel %vm540, %v1022, %v1020
      %v1025 = vsel %vm543, %v1024, 0.0
      %v1026 = vsel %vm544, %v1023, 0.0
      %v1027 = vadd.f32 %v967, %v1025
      %v1028 = vadd.f32 %v968, %v1026
      %s1029 = sld [smem:[#allocation5 + $0x34]]
      %v1030 = vstv %s1029
      %v1031 = vmul.f32 %v807, %v1030
      %v1032 = vmul.f32 %v808, %v1030
      %s1033 = sld [smem:[#allocation5 + $0x3b]]
      %v1034 = vstv %s1033
      %v1035 = vmul.f32 %v815, %v1034
      %v1036 = vmul.f32 %v816, %v1034
      %v1037 = vadd.f32 %v1031, %v1035
      %v1038 = vadd.f32 %v1032, %v1036
      %s1039 = sld [smem:[#allocation5 + $0x42]]
      %v1040 = vstv %s1039
      %v1041 = vmul.f32 %v823, %v1040
      %v1042 = vmul.f32 %v824, %v1040
      %v1043 = vadd.f32 %v1037, %v1041
      %v1044 = vadd.f32 %v1038, %v1042
      %s1045 = sld [smem:[#allocation5 + $0x49]]
      %v1046 = vstv %s1045
      %v1047 = vmul.f32 %v253, %v1046
      %v1050 = vunpack.c.l.s4 1983009808
      %v1051 = vunpack.c.0.s8 %v1050
      %v1052 = vlaneseq
      %v1053 = vshrl.u32 %v1052, 7
      %v1054 = vsub.s32 %v1051, %v1053
      %v1055 = vrot.slane %v1047, %v1054
      %v1056 = vcombine.high %v1055, %v1055
      %v1059 = vadd.f32 %v1043, %v1055
      %v1060 = vadd.f32 %v1044, %v1056
      %s1061 = sld [smem:[#allocation5 + $0x50]]
      %v1062 = vstv %s1061
      %v1063 = vmul.f32 %v831, %v1062
      %v1064 = vmul.f32 %v832, %v1062
      %v1065 = vadd.f32 %v1059, %v1063
      %v1066 = vadd.f32 %v1060, %v1064
      %s1067 = sld [smem:[#allocation5 + $0x57]]
      %v1068 = vstv %s1067
      %v1069 = vmul.f32 %v839, %v1068
      %v1070 = vmul.f32 %v840, %v1068
      %v1071 = vadd.f32 %v1065, %v1069
      %v1072 = vadd.f32 %v1066, %v1070
      %s1073 = sld [smem:[#allocation5 + $0x5e]]
      %v1074 = vstv %s1073
      %v1075 = vmul.f32 %v847, %v1074
      %v1076 = vmul.f32 %v848, %v1074
      %v1077 = vadd.f32 %v1071, %v1075
      %v1078 = vadd.f32 %v1072, %v1076
      %v1079 = vadd.f32 %v1027, %v1077
      %v1080 = vadd.f32 %v1028, %v1078
      %s1081 = sld [smem:[#allocation5 + $0x35]]
      %v1082 = vstv %s1081
      %v1083 = vmul.f32 %v807, %v1082
      %v1084 = vmul.f32 %v808, %v1082
      %s1085 = sld [smem:[#allocation5 + $0x3c]]
      %v1086 = vstv %s1085
      %v1087 = vmul.f32 %v815, %v1086
      %v1088 = vmul.f32 %v816, %v1086
      %v1089 = vadd.f32 %v1083, %v1087
      %v1090 = vadd.f32 %v1084, %v1088
      %s1091 = sld [smem:[#allocation5 + $0x43]]
      %v1092 = vstv %s1091
      %v1093 = vmul.f32 %v823, %v1092
      %v1094 = vmul.f32 %v824, %v1092
      %v1095 = vadd.f32 %v1089, %v1093
      %v1096 = vadd.f32 %v1090, %v1094
      %s1097 = sld [smem:[#allocation5 + $0x4a]]
      %v1098 = vstv %s1097
      %v1099 = vmul.f32 %v253, %v1098
      %v1102 = vunpack.c.l.s4 1983009808
      %v1103 = vunpack.c.0.s8 %v1102
      %v1104 = vlaneseq
      %v1105 = vshrl.u32 %v1104, 7
      %v1106 = vsub.s32 %v1103, %v1105
      %v1107 = vrot.slane %v1099, %v1106
      %v1108 = vcombine.high %v1107, %v1107
      %v1111 = vadd.f32 %v1095, %v1107
      %v1112 = vadd.f32 %v1096, %v1108
      %s1113 = sld [smem:[#allocation5 + $0x51]]
      %v1114 = vstv %s1113
      %v1115 = vmul.f32 %v831, %v1114
      %v1116 = vmul.f32 %v832, %v1114
      %v1117 = vadd.f32 %v1111, %v1115
      %v1118 = vadd.f32 %v1112, %v1116
      %s1119 = sld [smem:[#allocation5 + $0x58]]
      %v1120 = vstv %s1119
      %v1121 = vmul.f32 %v839, %v1120
      %v1122 = vmul.f32 %v840, %v1120
      %v1123 = vadd.f32 %v1117, %v1121
      %v1124 = vadd.f32 %v1118, %v1122
      %s1125 = sld [smem:[#allocation5 + $0x5f]]
      %v1126 = vstv %s1125
      %v1127 = vmul.f32 %v847, %v1126
      %v1128 = vmul.f32 %v848, %v1126
      %v1129 = vadd.f32 %v1123, %v1127
      %v1130 = vadd.f32 %v1124, %v1128
      %1131 = vrot.lane.b32.xlu0 %v1129, 127
      %v1132 = vpop.permute.xlu0 %1131
      %1133 = vrot.lane.b32.xlu0 %v1130, 127
      %v1134 = vpop.permute.xlu0 %1133
      %v1135 = vsel %vm655, %v1132, %v1134
      %v1136 = vsel %vm655, %v1134, %v1132
      %v1137 = vsel %vm658, %v1135, 0.0
      %v1138 = vsel %vm659, %v1136, 0.0
      %v1139 = vadd.f32 %v1079, %v1137
      %v1140 = vadd.f32 %v1080, %v1138
      %s1141 = sld [smem:[#allocation5 + $0x36]]
      %v1142 = vstv %s1141
      %v1143 = vmul.f32 %v807, %v1142
      %v1144 = vmul.f32 %v808, %v1142
      %s1145 = sld [smem:[#allocation5 + $0x3d]]
      %v1146 = vstv %s1145
      %v1147 = vmul.f32 %v815, %v1146
      %v1148 = vmul.f32 %v816, %v1146
      %v1149 = vadd.f32 %v1143, %v1147
      %v1150 = vadd.f32 %v1144, %v1148
      %s1151 = sld [smem:[#allocation5 + $0x44]]
      %v1152 = vstv %s1151
      %v1153 = vmul.f32 %v823, %v1152
      %v1154 = vmul.f32 %v824, %v1152
      %v1155 = vadd.f32 %v1149, %v1153
      %v1156 = vadd.f32 %v1150, %v1154
      %s1157 = sld [smem:[#allocation5 + $0x4b]]
      %v1158 = vstv %s1157
      %v1159 = vmul.f32 %v253, %v1158
      %v1162 = vunpack.c.l.s4 1983009808
      %v1163 = vunpack.c.0.s8 %v1162
      %v1164 = vlaneseq
      %v1165 = vshrl.u32 %v1164, 7
      %v1166 = vsub.s32 %v1163, %v1165
      %v1167 = vrot.slane %v1159, %v1166
      %v1168 = vcombine.high %v1167, %v1167
      %v1171 = vadd.f32 %v1155, %v1167
      %v1172 = vadd.f32 %v1156, %v1168
      %s1173 = sld [smem:[#allocation5 + $0x52]]
      %v1174 = vstv %s1173
      %v1175 = vmul.f32 %v831, %v1174
      %v1176 = vmul.f32 %v832, %v1174
      %v1177 = vadd.f32 %v1171, %v1175
      %v1178 = vadd.f32 %v1172, %v1176
      %s1179 = sld [smem:[#allocation5 + $0x59]]
      %v1180 = vstv %s1179
      %v1181 = vmul.f32 %v839, %v1180
      %v1182 = vmul.f32 %v840, %v1180
      %v1183 = vadd.f32 %v1177, %v1181
      %v1184 = vadd.f32 %v1178, %v1182
      %s1185 = sld [smem:[#allocation5 + $0x60]]
      %v1186 = vstv %s1185
      %v1187 = vmul.f32 %v847, %v1186
      %v1188 = vmul.f32 %v848, %v1186
      %v1189 = vadd.f32 %v1183, %v1187
      %v1190 = vadd.f32 %v1184, %v1188
      %1191 = vrot.lane.b32.xlu0 %v1189, 126
      %v1192 = vpop.permute.xlu0 %1191
      %1193 = vrot.lane.b32.xlu0 %v1190, 126
      %v1194 = vpop.permute.xlu0 %1193
      %v1195 = vsel %vm718, %v1192, %v1194
      %v1196 = vsel %vm718, %v1194, %v1192
      %v1197 = vsel %vm721, %v1195, 0.0
      %v1198 = vsel %vm722, %v1196, 0.0
      %v1199 = vadd.f32 %v1139, %v1197
      %v1200 = vadd.f32 %v1140, %v1198
      %s1201 = sld [smem:[#allocation5 + $0x37]]
      %v1202 = vstv %s1201
      %v1203 = vmul.f32 %v807, %v1202
      %v1204 = vmul.f32 %v808, %v1202
      %s1205 = sld [smem:[#allocation5 + $0x3e]]
      %v1206 = vstv %s1205
      %v1207 = vmul.f32 %v815, %v1206
      %v1208 = vmul.f32 %v816, %v1206
      %v1209 = vadd.f32 %v1203, %v1207
      %v1210 = vadd.f32 %v1204, %v1208
      %s1211 = sld [smem:[#allocation5 + $0x45]]
      %v1212 = vstv %s1211
      %v1213 = vmul.f32 %v823, %v1212
      %v1214 = vmul.f32 %v824, %v1212
      %v1215 = vadd.f32 %v1209, %v1213
      %v1216 = vadd.f32 %v1210, %v1214
      %s1217 = sld [smem:[#allocation5 + $0x4c]]
      %v1218 = vstv %s1217
      %v1219 = vmul.f32 %v253, %v1218
      %v1222 = vunpack.c.l.s4 1983009808
      %v1223 = vunpack.c.0.s8 %v1222
      %v1224 = vlaneseq
      %v1225 = vshrl.u32 %v1224, 7
      %v1226 = vsub.s32 %v1223, %v1225
      %v1227 = vrot.slane %v1219, %v1226
      %v1228 = vcombine.high %v1227, %v1227
      %v1231 = vadd.f32 %v1215, %v1227
      %v1232 = vadd.f32 %v1216, %v1228
      %s1233 = sld [smem:[#allocation5 + $0x53]]
      %v1234 = vstv %s1233
      %v1235 = vmul.f32 %v831, %v1234
      %v1236 = vmul.f32 %v832, %v1234
      %v1237 = vadd.f32 %v1231, %v1235
      %v1238 = vadd.f32 %v1232, %v1236
      %s1239 = sld [smem:[#allocation5 + $0x5a]]
      %v1240 = vstv %s1239
      %v1241 = vmul.f32 %v839, %v1240
      %v1242 = vmul.f32 %v840, %v1240
      %v1243 = vadd.f32 %v1237, %v1241
      %v1244 = vadd.f32 %v1238, %v1242
      %s1245 = sld [smem:[#allocation5 + $0x61]]
      %v1246 = vstv %s1245
      %v1247 = vmul.f32 %v847, %v1246
      %v1248 = vmul.f32 %v848, %v1246
      %v1249 = vadd.f32 %v1243, %v1247
      %v1250 = vadd.f32 %v1244, %v1248
      %1251 = vrot.lane.b32.xlu0 %v1249, 125
      %v1252 = vpop.permute.xlu0 %1251
      %1253 = vrot.lane.b32.xlu0 %v1250, 125
      %v1254 = vpop.permute.xlu0 %1253
      %v1255 = vsel %vm781, %v1252, %v1254
      %v1256 = vsel %vm781, %v1254, %v1252
      %v1257 = vsel %vm784, %v1255, 0.0
      %v1258 = vsel %vm785, %v1256, 0.0
      %v1259 = vadd.f32 %v1199, %v1257
      %v1260 = vadd.f32 %v1200, %v1258
      %v1261 = vsub.f32 0.0, %v1259
      %v1262 = vsub.f32 0.0, %v1260
      %v1263 = vmul.f32 %v1261, 1.442695
      %v1264 = vpow.pop %v1263
      %v1265 = vmul.f32 %v1262, 1.442695
      %v1266 = vpow.pop %v1265
      %v1267 = vadd.f32 %v1264, 1.0
      %v1268 = vadd.f32 %v1266, 1.0
      %v1269 = vrcp.pop %v1267
      %v1270 = vmul.f32 1.0, %v1269
      %v1271 = vrcp.pop %v1268
      %v1272 = vmul.f32 1.0, %v1271
      %v1275 = vcombine.low %v1270, %v1272
      %v1277 = vunpack.c.l.s4 1983009808
      %v1278 = vunpack.c.0.s8 %v1277
      %v1279 = vlaneseq
      %v1280 = vshrl.u32 %v1279, 7
      %v1281 = vsub.s32 %v1278, %v1280
      %v1282 = vrot.slane %v1275, %v1281
      %1284 = vst [vmem:[#allocation10] sm:$0xf] %v1282
    $region33: #{tpu_custom_call.1} parent=1 // pred_fallthru
      _
    // Predicated region
    $region34: #{tpu_custom_call.1} parent=1 // pred_check
      _
    $region35: #{tpu_custom_call.1} parent=1 // pred_check_branch
      %1286 = sbr.rel (0) target = $region37
    $region36: #{tpu_custom_call.1} parent=1 // pred_region
      %s1288 = ssub.s32 64, 64
      %1289 = vsyncadd [#allocation7], %s1288
      %s1291 = sshll.u32 [#allocation10], 4
      %s1292 = int_to_ptr.vmem [resolvable:$true] %s1291
      %1294 = dma.vmem_to_hbm [thread:$0]  %s1292, 64, %s3, [#allocation7]
    $region37: #{tpu_custom_call.1} parent=1 // pred_fallthru
      _
    // Predicated region
    $region38: #{tpu_custom_call.1} parent=1 // pred_check
      _
    $region39: #{tpu_custom_call.1} parent=1 // pred_check_branch
      %1296 = sbr.rel (0) target = $region41
    $region40: #{tpu_custom_call.1} parent=1 // pred_region
      %1297 = dma.done [#allocation7], 64
    $region41: #{tpu_custom_call.1} parent=1 // pred_fallthru
      _
    %1298 = vsyncpa [#allocation6], 1
    %1299 = vsyncpa [#allocation7], 1
    %1300 = vsyncpa [#allocation8], 1

</llo_original>
